<compile_context>
chip_gen: v7x
topology: tpu7x:2x2x1
jax: 0.10.0
libtpu: 0.0.40
codegen_flags: <defaults>
</compile_context>

<pallas_src>
import functools
import math

import jax
import jax.numpy as jnp
from jax.experimental import pallas as pl
from jax.experimental.pallas import tpu as pltpu


# bf16 MXU inputs (f32 accumulation) on all generations per perf review;
# set to jnp.float32 to reproduce the PyTorch reference numerics bit-closely.
MXU_DTYPE = jnp.bfloat16


def _round_up(x, m):
    return ((x + m - 1) // m) * m


# ---------------------------------------------------------------------------
# Fused ParallelWaveGANGenerator kernel (channels-first activations (C, T))
# ---------------------------------------------------------------------------

def _pwg_stack_kernel(*refs, k, T, pad, gate_half, c_skip, dilations, has_aux,
                      mxu_dtype):
    if has_aux:
        (x_ref, c_ref, fw_ref, fb_ref, wconv_ref, bconv_ref, wso_ref, bso_ref,
         l1w_ref, l1b_ref, l2w_ref, l2b_ref, out_ref, hpad_ref, skip_ref) = refs
    else:
        (x_ref, fw_ref, fb_ref, wconv_ref, bconv_ref, wso_ref, bso_ref,
         l1w_ref, l1b_ref, l2w_ref, l2b_ref, out_ref, hpad_ref, skip_ref) = refs
        c_ref = None

    f32 = jnp.float32
    half = (k - 1) // 2
    n_layers = len(dilations)
    Cres = hpad_ref.shape[0]
    Tpad = hpad_ref.shape[1]

    # Zero only the halo margins; the interior is rewritten every layer, so
    # the margins stay zero for every dilation <= max(dilations).
    if pad > 0:
        hpad_ref[:, pl.ds(0, pad)] = jnp.zeros((Cres, pad), f32)
        right = Tpad - pad - T
        hpad_ref[:, pl.ds(pad + T, right)] = jnp.zeros((Cres, right), f32)

    # first_conv (1x1): (Cres, Cin) @ (Cin, T) on the MXU, f32 accumulate.
    h0 = jnp.dot(fw_ref[...], x_ref[0].astype(mxu_dtype),
                 preferred_element_type=f32) + fb_ref[...]
    hpad_ref[:, pl.ds(pad, T)] = h0

    skip_ref[...] = jnp.zeros_like(skip_ref)
    c_val = c_ref[0] if has_aux else None

    # TODO(synk): for deep stacks (L ~ 30) switch this unrolled loop to
    # lax.fori_loop (dynamic wconv_ref[l] indexing, pl.ds tap starts) to bound
    # live ranges; at the tiny L used here full unrolling is preferred.
    for l, dil in enumerate(dilations):
        # All k dilated taps (+ aux features) are stacked along the
        # contraction axis and consumed by ONE MXU push per layer:
        # (Cgate, k*Cres[+Caux]) @ (k*Cres[+Caux], T).
        taps = [hpad_ref[:, pl.ds(pad + (j - half) * dil, T)]
                for j in range(k)]
        if has_aux:
            taps.append(c_val)
        lhs = jnp.concatenate(taps, axis=0).astype(mxu_dtype)
        acc = jnp.dot(wconv_ref[l], lhs,
                      preferred_element_type=f32) + bconv_ref[l]  # (Cgate, T)

        # Gated activation in f32 (v5e has no bf16 VPU/EUP path).
        z = jnp.tanh(acc[:gate_half, :]) * jax.nn.sigmoid(acc[gate_half:, :])

        # Fused skip + residual-out projection: one (Cskip+Cres, gh) @ (gh, T).
        so = jnp.dot(wso_ref[l], z.astype(mxu_dtype),
                     preferred_element_type=f32) + bso_ref[l]
        skip_ref[...] += so[:c_skip, :]
        h_res = hpad_ref[:, pl.ds(pad, T)]
        hpad_ref[:, pl.ds(pad, T)] = (so[c_skip:, :] + h_res) * math.sqrt(0.5)

    # last_conv_layers: ReLU -> 1x1 -> ReLU -> 1x1, fused.
    h1 = jnp.maximum(skip_ref[...] * math.sqrt(1.0 / n_layers), 0.0)
    h1 = jnp.dot(l1w_ref[...], h1.astype(mxu_dtype),
                 preferred_element_type=f32) + l1b_ref[...]
    h1 = jnp.maximum(h1, 0.0)
    o = jnp.dot(l2w_ref[...], h1.astype(mxu_dtype),
                preferred_element_type=f32) + l2b_ref[...]
    out_ref[0] = o.astype(out_ref.dtype)


def pwg_forward(p, x, c=None, mxu_dtype=None):
    """ParallelWaveGANGenerator forward, one fused pallas_call.

    x: (B, Cin, T) channels-first; c: (B, Caux, T) or None.
    Returns (B, Cout, T).
    """
    if mxu_dtype is None:
        mxu_dtype = MXU_DTYPE
    B, Cin, T = x.shape
    if p['aux_ch'] > 0:
        assert c is not None, "generator was built with aux conditioning"
    has_aux = (c is not None) and (p['aux_ch'] > 0)

    k = p['kernel_size']
    assert k % 2 == 1, "non-causal symmetric padding requires odd kernel size"
    dils = p['dilations']
    L = len(dils)
    half = (k - 1) // 2
    pad_need = half * max(dils)
    # Lane-align the scratch interior so the center tap, the residual
    # read-modify-write and the h0 store land on 128-aligned lane offsets.
    pad = _round_up(pad_need, 128) if pad_need > 0 else 0
    Tpad = pad + T + pad_need

    Cres = p['first_w'].shape[0]
    Cgate = p['wconv'].shape[1]
    Ktap = p['wconv'].shape[2]
    gate_half = Cgate // 2
    Cskip = p['last1_w'].shape[0]
    Cso = p['wso'].shape[1]
    Cout = p['last2_w'].shape[0]

    kern = functools.partial(
        _pwg_stack_kernel, k=k, T=T, pad=pad, gate_half=gate_half,
        c_skip=Cskip, dilations=dils, has_aux=has_aux, mxu_dtype=mxu_dtype)

    batched3 = lambda b: (b, 0, 0)
    const2 = lambda b: (0, 0)
    const3 = lambda b: (0, 0, 0)

    # Matmul weights pre-cast to the MXU dtype (halves their VMEM residency in
    # bf16); biases stay f32 and add straight into the f32 accumulators.
    cast = lambda w: w.astype(mxu_dtype)

    in_specs = [pl.BlockSpec((1, Cin, T), batched3)]
    inputs = [x]
    if has_aux:
        Caux = c.shape[1]
        in_specs.append(pl.BlockSpec((1, Caux, T), batched3))
        inputs.append(c)
    in_specs += [
        pl.BlockSpec((Cres, Cin), const2),
        pl.BlockSpec((Cres, 1), const2),
        pl.BlockSpec((L, Cgate, Ktap), const3),
        pl.BlockSpec((L, Cgate, 1), const3),
        pl.BlockSpec((L, Cso, gate_half), const3),
        pl.BlockSpec((L, Cso, 1), const3),
        pl.BlockSpec((Cskip, Cskip), const2),
        pl.BlockSpec((Cskip, 1), const2),
        pl.BlockSpec((Cout, Cskip), const2),
        pl.BlockSpec((Cout, 1), const2),
    ]
    inputs += [cast(p['first_w']), p['first_b'], cast(p['wconv']), p['bconv'],
               cast(p['wso']), p['bso'],
               cast(p['last1_w']), p['last1_b'],
               cast(p['last2_w']), p['last2_b']]

    flops = 2 * B * T * (Cin * Cres + L * (Ktap * Cgate + gate_half * Cso)
                         + Cskip * Cskip + Cskip * Cout)
    transcendentals = 2 * B * T * L * gate_half
    bytes_accessed = sum(int(v.size) * v.dtype.itemsize for v in inputs)
    bytes_accessed += B * Cout * T * x.dtype.itemsize

    out = pl.pallas_call(
        kern,
        grid=(B,),
        in_specs=in_specs,
        out_specs=pl.BlockSpec((1, Cout, T), batched3),
        out_shape=jax.ShapeDtypeStruct((B, Cout, T), x.dtype),
        scratch_shapes=[pltpu.VMEM((Cres, Tpad), jnp.float32),
                        pltpu.VMEM((Cskip, T), jnp.float32)],
        compiler_params=pltpu.CompilerParams(
            dimension_semantics=("parallel",),
            vmem_limit_bytes=64 * 1024 * 1024),
        cost_estimate=pl.CostEstimate(flops=int(flops),
                                      transcendentals=int(transcendentals),
                                      bytes_accessed=int(bytes_accessed)),
    )(*inputs)
    return out


# ---------------------------------------------------------------------------
# Vector quantization kernel (channels-first, lane-dense over T)
# ---------------------------------------------------------------------------

def _vq_kernel(x_ref, emb_ref, esq_ref, q_ref, idx_ref, *, mxu_dtype):
    x = x_ref[0]                                     # (D, Tt) f32
    e = emb_ref[...]                                 # (K, D)  f32
    K = e.shape[0]
    # Squared-distance argmin; the column-constant ||x||^2 term is dropped.
    xe = jnp.dot(e.astype(mxu_dtype), x.astype(mxu_dtype),
                 preferred_element_type=jnp.float32)            # (K, Tt)
    dist = esq_ref[...] - 2.0 * xe                              # lane-dense
    iota = jax.lax.broadcasted_iota(jnp.int32, dist.shape, 0)
    dmin = jnp.min(dist, axis=0, keepdims=True)                 # (1, Tt)
    # first-occurrence argmin (matches torch.argmin tie-breaking)
    idx = jnp.min(jnp.where(dist == dmin, iota, K), axis=0, keepdims=True)
    onehot = (iota == idx).astype(jnp.float32)                  # (K, Tt)
    # exact (f32) codebook lookup: contract K of (K, D) with (K, Tt) -> (D, Tt)
    q = jax.lax.dot_general(e, onehot, (((0,), (0,)), ((), ())),
                            preferred_element_type=jnp.float32)
    q_ref[0] = q.astype(q_ref.dtype)
    idx_ref[...] = idx[None].astype(jnp.int32)                  # (1, 1, Tt)


def vq_quantize(x_bdt, emb, tile_t=8192, mxu_dtype=None):
    """Quantize channels-first activations (bdt_flag=True path).

    x_bdt: (B, D, T).  Returns (emb_idx (B,T,D), emb_idx_qx (B,D,T), qidx (B,T)).
    """
    if mxu_dtype is None:
        mxu_dtype = MXU_DTYPE
    B, D, T = x_bdt.shape
    K = emb.shape[0]

    if T <= tile_t:
        tt, Tp = T, T
        xq = x_bdt
    else:
        tt = tile_t                               # multiple of 128
        Tp = _round_up(T, tt)
        xq = jnp.pad(x_bdt, ((0, 0), (0, 0), (0, Tp - T)))
    nt = Tp // tt

    e_sq = jnp.sum(emb * emb, axis=1, keepdims=True)            # (K, 1), once

    flops = 4 * B * Tp * K * D
    bytes_accessed = 4 * (int(xq.size) + int(emb.size) + int(e_sq.size)
                          + B * D * Tp + B * Tp)

    q, idx = pl.pallas_call(
        functools.partial(_vq_kernel, mxu_dtype=mxu_dtype),
        grid=(B, nt),
        in_specs=[
            pl.BlockSpec((1, D, tt), lambda b, t: (b, 0, t)),
            pl.BlockSpec((K, D), lambda b, t: (0, 0)),   # codebook resident
            pl.BlockSpec((K, 1), lambda b, t: (0, 0)),
        ],
        out_specs=[
            pl.BlockSpec((1, D, tt), lambda b, t: (b, 0, t)),
            pl.BlockSpec((1, 1, tt), lambda b, t: (b, 0, t)),
        ],
        out_shape=[
            jax.ShapeDtypeStruct((B, D, Tp), x_bdt.dtype),
            jax.ShapeDtypeStruct((B, 1, Tp), jnp.int32),
        ],
        compiler_params=pltpu.CompilerParams(
            dimension_semantics=("parallel", "parallel")),
        cost_estimate=pl.CostEstimate(flops=int(flops), transcendentals=0,
                                      bytes_accessed=int(bytes_accessed)),
    )(xq, emb, e_sq)

    q = q[:, :, :T]
    qidx = idx[:, 0, :T]
    emb_idx = jnp.transpose(q, (0, 2, 1))            # (B, T, D), like torch
    # straight-through estimator: forward value == quantized embedding
    emb_idx_qx = x_bdt + jax.lax.stop_gradient(q - x_bdt)
    return emb_idx, emb_idx_qx, qidx


# ---------------------------------------------------------------------------
# Parameter construction
# ---------------------------------------------------------------------------

def init_pwg_params(key, in_ch, out_ch, kernel_size, layers, stacks,
                    res_ch, gate_ch, skip_ch, aux_ch):
    layers_per_stack = layers // stacks
    gate_half = gate_ch // 2
    ks = iter(jax.random.split(key, 16))

    def w(shape, scale=0.1):
        return scale * jax.random.normal(next(ks), shape, jnp.float32)

    # Per-layer dilated-conv weights (Cgate, k, Cres) are fused at init time
    # into one (Cgate, k*Cres [+ Caux]) contraction per layer; a checkpoint
    # port would do the same reshape/concat once at load time.
    wconv = w((layers, gate_ch, kernel_size, res_ch)).reshape(
        layers, gate_ch, kernel_size * res_ch)
    if aux_ch > 0:
        wconv = jnp.concatenate([wconv, w((layers, gate_ch, aux_ch))], axis=2)
    # Skip (Cskip) and residual-out (Cres) 1x1 convs fused into one projection.
    wskip = w((layers, skip_ch, gate_half))
    bskip = w((layers, skip_ch, 1), 0.01)
    wout = w((layers, res_ch, gate_half))
    bout = w((layers, res_ch, 1), 0.01)

    return {
        'kernel_size': kernel_size,
        'aux_ch': aux_ch,
        'dilations': tuple(2 ** (l % layers_per_stack) for l in range(layers)),
        'first_w': w((res_ch, in_ch)),
        'first_b': w((res_ch, 1), 0.01),
        'wconv': wconv,
        'bconv': w((layers, gate_ch, 1), 0.01),
        'wso': jnp.concatenate([wskip, wout], axis=1),
        'bso': jnp.concatenate([bskip, bout], axis=1),
        'last1_w': w((skip_ch, skip_ch)),
        'last1_b': w((skip_ch, 1), 0.01),
        'last2_w': w((out_ch, skip_ch)),
        'last2_b': w((out_ch, 1), 0.01),
    }


def init_vqvae2(key, nc, spkr_size):
    n = nc['n_vq_stacks']
    keys = jax.random.split(key, 3 * n)
    encoders, decoders, embs = [], [], []
    for i in range(n):
        if i == 0:
            enc_in = nc['input_size']
            enc_out = nc['emb_dim'][0] + spkr_size
            enc_aux = nc['enc_aux_size']
            dec_in = sum(nc['emb_dim'][j] for j in range(n))
            dec_out = nc['output_size']
            dec_aux = nc['dec_aux_size'] + spkr_size
        else:
            enc_in = nc['emb_dim'][i - 1]
            enc_out = nc['emb_dim'][i]
            enc_aux = 0
            dec_in = nc['emb_dim'][i]
            dec_out = nc['emb_dim'][i - 1]
            dec_aux = 0
        layers = nc['n_layers'][i] * nc['n_layers_stacks'][i]
        stacks = nc['n_layers_stacks'][i]
        encoders.append(init_pwg_params(keys[3 * i], enc_in, enc_out,
                                        nc['kernel_size'][i], layers, stacks,
                                        nc['residual_channels'], 128, 64, enc_aux))
        decoders.append(init_pwg_params(keys[3 * i + 1], dec_in, dec_out,
                                        nc['kernel_size'][i], layers, stacks,
                                        nc['residual_channels'], 128, 64, dec_aux))
        K, D = nc['emb_size'][i], nc['emb_dim'][i]
        embs.append(jax.random.uniform(keys[3 * i + 2], (K, D), jnp.float32,
                                       -1.0 / K, 1.0 / K))
    return {'encoders': encoders, 'decoders': decoders, 'emb': embs}


# ---------------------------------------------------------------------------
# VQVAE2 forward (channels-first internally, like the PyTorch module)
# ---------------------------------------------------------------------------

def vqvae2_encode(params, nc, spkr_size, x_bct, enc_h=None):
    encoded = []
    spkr_cls = None
    for n in range(nc['n_vq_stacks']):
        if n == 0:
            enc = pwg_forward(params['encoders'][0], x_bct, c=enc_h)
            d0 = nc['emb_dim'][0]
            enc, spkr_cls = enc[:, :d0, :], enc[:, d0:d0 + spkr_size, :]
        else:
            enc = pwg_forward(params['encoders'][n], enc, c=None)
        encoded.append(enc)
    return encoded, spkr_cls


def vqvae2_decode(params, nc, enc, dec_h):
    dec = 0
    emb_idxs, emb_idx_qxs, qidxs = [], [], []
    enc = list(enc)
    for n in reversed(range(nc['n_vq_stacks'])):
        enc[n] = enc[n] + dec
        emb_idx, emb_idx_qx, qidx = vq_quantize(enc[n], params['emb'][n])
        emb_idxs.append(emb_idx)          # (B, T, D), matches torch embed_idx
        emb_idx_qxs.append(emb_idx_qx)    # (B, D, T), channels-first
        qidxs.append(qidx)
        if n != 0:
            dec = pwg_forward(params['decoders'][n], emb_idx_qx, c=None)
        else:
            dec = pwg_forward(params['decoders'][0],
                              jnp.concatenate(emb_idx_qxs, axis=1), c=dec_h)
    return enc, dec, emb_idxs, emb_idx_qxs, qidxs


def vqvae2_forward(params, nc, spkr_size, x, enc_h=None, dec_h=None):
    # PyTorch: transpose (B, T, C) -> (B, C, T) at entry; channels-first inside.
    to_bct = lambda a: jnp.transpose(a, (0, 2, 1))
    x_bct = to_bct(x)
    enc_h_bct = to_bct(enc_h) if enc_h is not None else None
    dec_h_bct = to_bct(dec_h) if dec_h is not None else None

    enc, spkr_cls = vqvae2_encode(params, nc, spkr_size, x_bct, enc_h=enc_h_bct)
    enc, dec, emb_idxs, _, qidxs = vqvae2_decode(params, nc, enc, dec_h_bct)

    # make_dict: transpose encoded / spkr_cls / decoded back to (B, T, C).
    to_btc = lambda a: jnp.transpose(a, (0, 2, 1))
    return {
        'encoded': [to_btc(e) for e in enc],
        'spkr_cls': to_btc(spkr_cls) if spkr_cls is not None else None,
        'decoded': to_btc(dec),
        'emb_idx': emb_idxs[::-1],
        'qidx': qidxs[::-1],
    }


# ---------------------------------------------------------------------------
# main
# ---------------------------------------------------------------------------

if __name__ == "__main__":
    net_conf = {
        'input_size': 8,
        'output_size': 8,
        'n_vq_stacks': 2,
        'n_layers': [2, 2],
        'n_layers_stacks': [1, 1],
        'kernel_size': [3, 3],
        'emb_dim': [8, 8],
        'emb_size': [16, 16],
        'residual_channels': 16,
        'enc_aux_size': 0,
        'dec_aux_size': 2,
        'causal': False,
        'ema_flag': False,
        'n_cycles': 1,
    }
    spkr_size = 4
    B, T = 2, 16

    key = jax.random.PRNGKey(0)
    k_params, k_x, k_dec = jax.random.split(key, 3)
    params = init_vqvae2(k_params, net_conf, spkr_size)

    x = jax.random.normal(k_x, (B, T, net_conf['input_size']), jnp.float32)
    dec_h = jax.random.normal(
        k_dec, (B, T, net_conf['dec_aux_size'] + spkr_size), jnp.float32)

    outputs = vqvae2_forward(params, net_conf, spkr_size, x,
                             enc_h=None, dec_h=dec_h)
    jax.block_until_ready(outputs)
    print("KERNEL_OK")
</pallas_src>

<mosaic_0001>
module attributes {stable_mosaic.version = 11 : i64} {
  func.func @_pwg_stack_kernel(%arg0: i32, %arg1: memref<1x8x16xf32, #tpu.memory_space<vmem>>, %arg2: memref<16x8xbf16, #tpu.memory_space<vmem>>, %arg3: memref<16x1xf32, #tpu.memory_space<vmem>>, %arg4: memref<2x128x48xbf16, #tpu.memory_space<vmem>>, %arg5: memref<2x128x1xf32, #tpu.memory_space<vmem>>, %arg6: memref<2x80x64xbf16, #tpu.memory_space<vmem>>, %arg7: memref<2x80x1xf32, #tpu.memory_space<vmem>>, %arg8: memref<64x64xbf16, #tpu.memory_space<vmem>>, %arg9: memref<64x1xf32, #tpu.memory_space<vmem>>, %arg10: memref<12x64xbf16, #tpu.memory_space<vmem>>, %arg11: memref<12x1xf32, #tpu.memory_space<vmem>>, %arg12: memref<1x12x16xf32, #tpu.memory_space<vmem>>, %arg13: memref<16x146xf32, #tpu.memory_space<vmem>>, %arg14: memref<64x16xf32, #tpu.memory_space<vmem>>) attributes {dimension_semantics = [#tpu.dimension_semantics<parallel>], iteration_bounds = array<i64: 2>, scalar_prefetch = 0 : i64, scratch_operands = 2 : i64, tpu.core_type = #tpu.core_type<tc>, window_params = [{transform_indices = @transform_0, window_bounds = array<i64: 1, 8, 16>}, {pipeline_mode = #tpu.pipeline_mode<synchronous>, transform_indices = @transform_1, window_bounds = array<i64: 16, 8>}, {pipeline_mode = #tpu.pipeline_mode<synchronous>, transform_indices = @transform_2, window_bounds = array<i64: 16, 1>}, {pipeline_mode = #tpu.pipeline_mode<synchronous>, transform_indices = @transform_3, window_bounds = array<i64: 2, 128, 48>}, {pipeline_mode = #tpu.pipeline_mode<synchronous>, transform_indices = @transform_4, window_bounds = array<i64: 2, 128, 1>}, {pipeline_mode = #tpu.pipeline_mode<synchronous>, transform_indices = @transform_5, window_bounds = array<i64: 2, 80, 64>}, {pipeline_mode = #tpu.pipeline_mode<synchronous>, transform_indices = @transform_6, window_bounds = array<i64: 2, 80, 1>}, {pipeline_mode = #tpu.pipeline_mode<synchronous>, transform_indices = @transform_7, window_bounds = array<i64: 64, 64>}, {pipeline_mode = #tpu.pipeline_mode<synchronous>, transform_indices = @transform_8, window_bounds = array<i64: 64, 1>}, {pipeline_mode = #tpu.pipeline_mode<synchronous>, transform_indices = @transform_9, window_bounds = array<i64: 12, 64>}, {pipeline_mode = #tpu.pipeline_mode<synchronous>, transform_indices = @transform_10, window_bounds = array<i64: 12, 1>}, {transform_indices = @transform_11, window_bounds = array<i64: 1, 12, 16>}]} {
    %cst = arith.constant 0.000000e+00 : f32
    %0 = vector.broadcast %cst : f32 to vector<16x128xf32>
    %c0 = arith.constant 0 : index
    %c0_0 = arith.constant 0 : index
    %1 = vector.load %arg13[%c0, %c0_0] : memref<16x146xf32, #tpu.memory_space<vmem>>, vector<16x128xf32>
    tpu.vector_store %arg13[%c0, %c0_0], %0 {strides = array<i32>} : memref<16x146xf32, #tpu.memory_space<vmem>>, vector<16x128xf32>,
    %cst_1 = arith.constant 0.000000e+00 : f32
    %2 = vector.broadcast %cst_1 : f32 to vector<16x2xf32>
    %c0_2 = arith.constant 0 : index
    %c144 = arith.constant 144 : index
    %3 = vector.load %arg13[%c0_2, %c144] : memref<16x146xf32, #tpu.memory_space<vmem>>, vector<16x2xf32>
    tpu.vector_store %arg13[%c0_2, %c144], %2 {strides = array<i32>} : memref<16x146xf32, #tpu.memory_space<vmem>>, vector<16x2xf32>,
    %c0_3 = arith.constant 0 : index
    %c0_4 = arith.constant 0 : index
    %4 = vector.load %arg2[%c0_3, %c0_4] : memref<16x8xbf16, #tpu.memory_space<vmem>>, vector<16x8xbf16>
    %c0_5 = arith.constant 0 : index
    %c0_6 = arith.constant 0 : index
    %c0_7 = arith.constant 0 : index
    %5 = vector.load %arg1[%c0_5, %c0_6, %c0_7] : memref<1x8x16xf32, #tpu.memory_space<vmem>>, vector<1x8x16xf32>
    %6 = vector.shape_cast %5 : vector<1x8x16xf32> to vector<8x16xf32>
    %7 = arith.truncf %6 : vector<8x16xf32> to vector<8x16xbf16>
    %cst_8 = arith.constant dense<0.000000e+00> : vector<16x16xf32>
    %8 = tpu.matmul %4, %7, %cst_8 {dimension_numbers = #tpu.dot_dimension_numbers<[1], [0], [0], [1], [0, 0, 1, 1], [], []>} : vector<16x8xbf16>, vector<8x16xbf16>, vector<16x16xf32> -> vector<16x16xf32>
    %c0_9 = arith.constant 0 : index
    %c0_10 = arith.constant 0 : index
    %9 = vector.load %arg3[%c0_9, %c0_10] : memref<16x1xf32, #tpu.memory_space<vmem>>, vector<16x1xf32>
    %10 = vector.broadcast %9 : vector<16x1xf32> to vector<16x16xf32>
    %11 = arith.addf %8, %10 : vector<16x16xf32>
    %c0_11 = arith.constant 0 : index
    %c128 = arith.constant 128 : index
    %12 = vector.load %arg13[%c0_11, %c128] : memref<16x146xf32, #tpu.memory_space<vmem>>, vector<16x16xf32>
    tpu.vector_store %arg13[%c0_11, %c128], %11 {strides = array<i32>} : memref<16x146xf32, #tpu.memory_space<vmem>>, vector<16x16xf32>,
    %cst_12 = arith.constant 0.000000e+00 : f32
    %13 = vector.broadcast %cst_12 : f32 to vector<64x16xf32>
    %c0_13 = arith.constant 0 : index
    %c0_14 = arith.constant 0 : index
    %14 = vector.load %arg14[%c0_13, %c0_14] : memref<64x16xf32, #tpu.memory_space<vmem>>, vector<64x16xf32>
    tpu.vector_store %arg14[%c0_13, %c0_14], %13 {strides = array<i32>} : memref<64x16xf32, #tpu.memory_space<vmem>>, vector<64x16xf32>,
    %c0_15 = arith.constant 0 : index
    %c127 = arith.constant 127 : index
    %15 = vector.load %arg13[%c0_15, %c127] : memref<16x146xf32, #tpu.memory_space<vmem>>, vector<16x16xf32>
    %c0_16 = arith.constant 0 : index
    %c128_17 = arith.constant 128 : index
    %16 = vector.load %arg13[%c0_16, %c128_17] : memref<16x146xf32, #tpu.memory_space<vmem>>, vector<16x16xf32>
    %c0_18 = arith.constant 0 : index
    %c129 = arith.constant 129 : index
    %17 = vector.load %arg13[%c0_18, %c129] : memref<16x146xf32, #tpu.memory_space<vmem>>, vector<16x16xf32>
    %18 = tpu.concatenate %15, %16, %17 in 0 : vector<16x16xf32>, vector<16x16xf32>, vector<16x16xf32> -> vector<48x16xf32>
    %19 = arith.truncf %18 : vector<48x16xf32> to vector<48x16xbf16>
    %c0_19 = arith.constant 0 : index
    %c0_20 = arith.constant 0 : index
    %c0_21 = arith.constant 0 : index
    %20 = vector.load %arg4[%c0_19, %c0_20, %c0_21] : memref<2x128x48xbf16, #tpu.memory_space<vmem>>, vector<1x128x48xbf16>
    %21 = vector.shape_cast %20 : vector<1x128x48xbf16> to vector<128x48xbf16>
    %cst_22 = arith.constant dense<0.000000e+00> : vector<128x16xf32>
    %22 = tpu.matmul %21, %19, %cst_22 {dimension_numbers = #tpu.dot_dimension_numbers<[1], [0], [0], [1], [0, 0, 1, 1], [], []>} : vector<128x48xbf16>, vector<48x16xbf16>, vector<128x16xf32> -> vector<128x16xf32>
    %c0_23 = arith.constant 0 : index
    %c0_24 = arith.constant 0 : index
    %c0_25 = arith.constant 0 : index
    %23 = vector.load %arg5[%c0_23, %c0_24, %c0_25] : memref<2x128x1xf32, #tpu.memory_space<vmem>>, vector<1x128x1xf32>
    %24 = vector.shape_cast %23 : vector<1x128x1xf32> to vector<128x1xf32>
    %25 = vector.broadcast %24 : vector<128x1xf32> to vector<128x16xf32>
    %26 = arith.addf %22, %25 : vector<128x16xf32>
    %27 = vector.extract_strided_slice %26 {offsets = [0, 0], sizes = [64, 16], strides = [1, 1]} : vector<128x16xf32> to vector<64x16xf32>
    %28 = math.tanh %27 : vector<64x16xf32>
    %29 = vector.extract_strided_slice %26 {offsets = [64, 0], sizes = [64, 16], strides = [1, 1]} : vector<128x16xf32> to vector<64x16xf32>
    %30 = arith.negf %29 : vector<64x16xf32>
    %31 = math.exp %30 : vector<64x16xf32>
    %cst_26 = arith.constant 1.000000e+00 : f32
    %32 = vector.broadcast %cst_26 : f32 to vector<64x16xf32>
    %33 = arith.addf %32, %31 : vector<64x16xf32>
    %34 = arith.divf %32, %33 : vector<64x16xf32>
    %35 = arith.mulf %28, %34 : vector<64x16xf32>
    %c0_27 = arith.constant 0 : index
    %c0_28 = arith.constant 0 : index
    %c0_29 = arith.constant 0 : index
    %36 = vector.load %arg6[%c0_27, %c0_28, %c0_29] : memref<2x80x64xbf16, #tpu.memory_space<vmem>>, vector<1x80x64xbf16>
    %37 = vector.shape_cast %36 : vector<1x80x64xbf16> to vector<80x64xbf16>
    %38 = arith.truncf %35 : vector<64x16xf32> to vector<64x16xbf16>
    %cst_30 = arith.constant dense<0.000000e+00> : vector<80x16xf32>
    %39 = tpu.matmul %37, %38, %cst_30 {dimension_numbers = #tpu.dot_dimension_numbers<[1], [0], [0], [1], [0, 0, 1, 1], [], []>} : vector<80x64xbf16>, vector<64x16xbf16>, vector<80x16xf32> -> vector<80x16xf32>
    %c0_31 = arith.constant 0 : index
    %c0_32 = arith.constant 0 : index
    %c0_33 = arith.constant 0 : index
    %40 = vector.load %arg7[%c0_31, %c0_32, %c0_33] : memref<2x80x1xf32, #tpu.memory_space<vmem>>, vector<1x80x1xf32>
    %41 = vector.shape_cast %40 : vector<1x80x1xf32> to vector<80x1xf32>
    %42 = vector.broadcast %41 : vector<80x1xf32> to vector<80x16xf32>
    %43 = arith.addf %39, %42 : vector<80x16xf32>
    %c0_34 = arith.constant 0 : index
    %c0_35 = arith.constant 0 : index
    %44 = vector.load %arg14[%c0_34, %c0_35] : memref<64x16xf32, #tpu.memory_space<vmem>>, vector<64x16xf32>
    %45 = vector.extract_strided_slice %43 {offsets = [0, 0], sizes = [64, 16], strides = [1, 1]} : vector<80x16xf32> to vector<64x16xf32>
    %46 = arith.addf %44, %45 : vector<64x16xf32>
    %c0_36 = arith.constant 0 : index
    %c0_37 = arith.constant 0 : index
    %47 = vector.load %arg14[%c0_36, %c0_37] : memref<64x16xf32, #tpu.memory_space<vmem>>, vector<64x16xf32>
    tpu.vector_store %arg14[%c0_36, %c0_37], %46 {strides = array<i32>} : memref<64x16xf32, #tpu.memory_space<vmem>>, vector<64x16xf32>,
    %c0_38 = arith.constant 0 : index
    %c128_39 = arith.constant 128 : index
    %48 = vector.load %arg13[%c0_38, %c128_39] : memref<16x146xf32, #tpu.memory_space<vmem>>, vector<16x16xf32>
    %49 = vector.extract_strided_slice %43 {offsets = [64, 0], sizes = [16, 16], strides = [1, 1]} : vector<80x16xf32> to vector<16x16xf32>
    %50 = arith.addf %49, %48 : vector<16x16xf32>
    %cst_40 = arith.constant 0.707106769 : f32
    %51 = vector.broadcast %cst_40 : f32 to vector<16x16xf32>
    %52 = arith.mulf %50, %51 : vector<16x16xf32>
    %c0_41 = arith.constant 0 : index
    %c128_42 = arith.constant 128 : index
    %53 = vector.load %arg13[%c0_41, %c128_42] : memref<16x146xf32, #tpu.memory_space<vmem>>, vector<16x16xf32>
    tpu.vector_store %arg13[%c0_41, %c128_42], %52 {strides = array<i32>} : memref<16x146xf32, #tpu.memory_space<vmem>>, vector<16x16xf32>,
    %c0_43 = arith.constant 0 : index
    %c126 = arith.constant 126 : index
    %54 = vector.load %arg13[%c0_43, %c126] : memref<16x146xf32, #tpu.memory_space<vmem>>, vector<16x16xf32>
    %c0_44 = arith.constant 0 : index
    %c128_45 = arith.constant 128 : index
    %55 = vector.load %arg13[%c0_44, %c128_45] : memref<16x146xf32, #tpu.memory_space<vmem>>, vector<16x16xf32>
    %c0_46 = arith.constant 0 : index
    %c130 = arith.constant 130 : index
    %56 = vector.load %arg13[%c0_46, %c130] : memref<16x146xf32, #tpu.memory_space<vmem>>, vector<16x16xf32>
    %57 = tpu.concatenate %54, %55, %56 in 0 : vector<16x16xf32>, vector<16x16xf32>, vector<16x16xf32> -> vector<48x16xf32>
    %58 = arith.truncf %57 : vector<48x16xf32> to vector<48x16xbf16>
    %c1 = arith.constant 1 : index
    %c0_47 = arith.constant 0 : index
    %c0_48 = arith.constant 0 : index
    %59 = vector.load %arg4[%c1, %c0_47, %c0_48] : memref<2x128x48xbf16, #tpu.memory_space<vmem>>, vector<1x128x48xbf16>
    %60 = vector.shape_cast %59 : vector<1x128x48xbf16> to vector<128x48xbf16>
    %cst_49 = arith.constant dense<0.000000e+00> : vector<128x16xf32>
    %61 = tpu.matmul %60, %58, %cst_49 {dimension_numbers = #tpu.dot_dimension_numbers<[1], [0], [0], [1], [0, 0, 1, 1], [], []>} : vector<128x48xbf16>, vector<48x16xbf16>, vector<128x16xf32> -> vector<128x16xf32>
    %c1_50 = arith.constant 1 : index
    %c0_51 = arith.constant 0 : index
    %c0_52 = arith.constant 0 : index
    %62 = vector.load %arg5[%c1_50, %c0_51, %c0_52] : memref<2x128x1xf32, #tpu.memory_space<vmem>>, vector<1x128x1xf32>
    %63 = vector.shape_cast %62 : vector<1x128x1xf32> to vector<128x1xf32>
    %64 = vector.broadcast %63 : vector<128x1xf32> to vector<128x16xf32>
    %65 = arith.addf %61, %64 : vector<128x16xf32>
    %66 = vector.extract_strided_slice %65 {offsets = [0, 0], sizes = [64, 16], strides = [1, 1]} : vector<128x16xf32> to vector<64x16xf32>
    %67 = math.tanh %66 : vector<64x16xf32>
    %68 = vector.extract_strided_slice %65 {offsets = [64, 0], sizes = [64, 16], strides = [1, 1]} : vector<128x16xf32> to vector<64x16xf32>
    %69 = arith.negf %68 : vector<64x16xf32>
    %70 = math.exp %69 : vector<64x16xf32>
    %cst_53 = arith.constant 1.000000e+00 : f32
    %71 = vector.broadcast %cst_53 : f32 to vector<64x16xf32>
    %72 = arith.addf %71, %70 : vector<64x16xf32>
    %73 = arith.divf %71, %72 : vector<64x16xf32>
    %74 = arith.mulf %67, %73 : vector<64x16xf32>
    %c1_54 = arith.constant 1 : index
    %c0_55 = arith.constant 0 : index
    %c0_56 = arith.constant 0 : index
    %75 = vector.load %arg6[%c1_54, %c0_55, %c0_56] : memref<2x80x64xbf16, #tpu.memory_space<vmem>>, vector<1x80x64xbf16>
    %76 = vector.shape_cast %75 : vector<1x80x64xbf16> to vector<80x64xbf16>
    %77 = arith.truncf %74 : vector<64x16xf32> to vector<64x16xbf16>
    %cst_57 = arith.constant dense<0.000000e+00> : vector<80x16xf32>
    %78 = tpu.matmul %76, %77, %cst_57 {dimension_numbers = #tpu.dot_dimension_numbers<[1], [0], [0], [1], [0, 0, 1, 1], [], []>} : vector<80x64xbf16>, vector<64x16xbf16>, vector<80x16xf32> -> vector<80x16xf32>
    %c1_58 = arith.constant 1 : index
    %c0_59 = arith.constant 0 : index
    %c0_60 = arith.constant 0 : index
    %79 = vector.load %arg7[%c1_58, %c0_59, %c0_60] : memref<2x80x1xf32, #tpu.memory_space<vmem>>, vector<1x80x1xf32>
    %80 = vector.shape_cast %79 : vector<1x80x1xf32> to vector<80x1xf32>
    %81 = vector.broadcast %80 : vector<80x1xf32> to vector<80x16xf32>
    %82 = arith.addf %78, %81 : vector<80x16xf32>
    %c0_61 = arith.constant 0 : index
    %c0_62 = arith.constant 0 : index
    %83 = vector.load %arg14[%c0_61, %c0_62] : memref<64x16xf32, #tpu.memory_space<vmem>>, vector<64x16xf32>
    %84 = vector.extract_strided_slice %82 {offsets = [0, 0], sizes = [64, 16], strides = [1, 1]} : vector<80x16xf32> to vector<64x16xf32>
    %85 = arith.addf %83, %84 : vector<64x16xf32>
    %c0_63 = arith.constant 0 : index
    %c0_64 = arith.constant 0 : index
    %86 = vector.load %arg14[%c0_63, %c0_64] : memref<64x16xf32, #tpu.memory_space<vmem>>, vector<64x16xf32>
    tpu.vector_store %arg14[%c0_63, %c0_64], %85 {strides = array<i32>} : memref<64x16xf32, #tpu.memory_space<vmem>>, vector<64x16xf32>,
    %c0_65 = arith.constant 0 : index
    %c128_66 = arith.constant 128 : index
    %87 = vector.load %arg13[%c0_65, %c128_66] : memref<16x146xf32, #tpu.memory_space<vmem>>, vector<16x16xf32>
    %88 = vector.extract_strided_slice %82 {offsets = [64, 0], sizes = [16, 16], strides = [1, 1]} : vector<80x16xf32> to vector<16x16xf32>
    %89 = arith.addf %88, %87 : vector<16x16xf32>
    %cst_67 = arith.constant 0.707106769 : f32
    %90 = vector.broadcast %cst_67 : f32 to vector<16x16xf32>
    %91 = arith.mulf %89, %90 : vector<16x16xf32>
    %c0_68 = arith.constant 0 : index
    %c128_69 = arith.constant 128 : index
    %92 = vector.load %arg13[%c0_68, %c128_69] : memref<16x146xf32, #tpu.memory_space<vmem>>, vector<16x16xf32>
    tpu.vector_store %arg13[%c0_68, %c128_69], %91 {strides = array<i32>} : memref<16x146xf32, #tpu.memory_space<vmem>>, vector<16x16xf32>,
    %c0_70 = arith.constant 0 : index
    %c0_71 = arith.constant 0 : index
    %93 = vector.load %arg14[%c0_70, %c0_71] : memref<64x16xf32, #tpu.memory_space<vmem>>, vector<64x16xf32>
    %cst_72 = arith.constant 0.707106769 : f32
    %94 = vector.broadcast %cst_72 : f32 to vector<64x16xf32>
    %95 = arith.mulf %93, %94 : vector<64x16xf32>
    %cst_73 = arith.constant 0.000000e+00 : f32
    %96 = vector.broadcast %cst_73 : f32 to vector<64x16xf32>
    %97 = arith.maximumf %95, %96 : vector<64x16xf32>
    %c0_74 = arith.constant 0 : index
    %c0_75 = arith.constant 0 : index
    %98 = vector.load %arg8[%c0_74, %c0_75] : memref<64x64xbf16, #tpu.memory_space<vmem>>, vector<64x64xbf16>
    %99 = arith.truncf %97 : vector<64x16xf32> to vector<64x16xbf16>
    %cst_76 = arith.constant dense<0.000000e+00> : vector<64x16xf32>
    %100 = tpu.matmul %98, %99, %cst_76 {dimension_numbers = #tpu.dot_dimension_numbers<[1], [0], [0], [1], [0, 0, 1, 1], [], []>} : vector<64x64xbf16>, vector<64x16xbf16>, vector<64x16xf32> -> vector<64x16xf32>
    %c0_77 = arith.constant 0 : index
    %c0_78 = arith.constant 0 : index
    %101 = vector.load %arg9[%c0_77, %c0_78] : memref<64x1xf32, #tpu.memory_space<vmem>>, vector<64x1xf32>
    %102 = vector.broadcast %101 : vector<64x1xf32> to vector<64x16xf32>
    %103 = arith.addf %100, %102 : vector<64x16xf32>
    %cst_79 = arith.constant 0.000000e+00 : f32
    %104 = vector.broadcast %cst_79 : f32 to vector<64x16xf32>
    %105 = arith.maximumf %103, %104 : vector<64x16xf32>
    %c0_80 = arith.constant 0 : index
    %c0_81 = arith.constant 0 : index
    %106 = vector.load %arg10[%c0_80, %c0_81] : memref<12x64xbf16, #tpu.memory_space<vmem>>, vector<12x64xbf16>
    %107 = arith.truncf %105 : vector<64x16xf32> to vector<64x16xbf16>
    %cst_82 = arith.constant dense<0.000000e+00> : vector<12x16xf32>
    %108 = tpu.matmul %106, %107, %cst_82 {dimension_numbers = #tpu.dot_dimension_numbers<[1], [0], [0], [1], [0, 0, 1, 1], [], []>} : vector<12x64xbf16>, vector<64x16xbf16>, vector<12x16xf32> -> vector<12x16xf32>
    %c0_83 = arith.constant 0 : index
    %c0_84 = arith.constant 0 : index
    %109 = vector.load %arg11[%c0_83, %c0_84] : memref<12x1xf32, #tpu.memory_space<vmem>>, vector<12x1xf32>
    %110 = vector.broadcast %109 : vector<12x1xf32> to vector<12x16xf32>
    %111 = arith.addf %108, %110 : vector<12x16xf32>
    %c0_85 = arith.constant 0 : index
    %c0_86 = arith.constant 0 : index
    %c0_87 = arith.constant 0 : index
    %112 = vector.load %arg12[%c0_85, %c0_86, %c0_87] : memref<1x12x16xf32, #tpu.memory_space<vmem>>, vector<1x12x16xf32>
    %113 = vector.shape_cast %112 : vector<1x12x16xf32> to vector<12x16xf32>
    %114 = vector.shape_cast %111 : vector<12x16xf32> to vector<1x12x16xf32>
    tpu.vector_store %arg12[%c0_85, %c0_86, %c0_87], %114 {strides = array<i32>} : memref<1x12x16xf32, #tpu.memory_space<vmem>>, vector<1x12x16xf32>,
    return
  }
  func.func @transform_0(%arg0: i32) -> (i32, i32, i32) {
    %c0_i32 = arith.constant 0 : i32
    %c0_i32_0 = arith.constant 0 : i32
    %c0_i32_1 = arith.constant 0 : i32
    return %arg0, %c0_i32, %c0_i32_0 : i32, i32, i32
  }
  func.func @transform_1(%arg0: i32) -> (i32, i32) {
    %c0_i32 = arith.constant 0 : i32
    %c0_i32_0 = arith.constant 0 : i32
    %c0_i32_1 = arith.constant 0 : i32
    return %c0_i32, %c0_i32_0 : i32, i32
  }
  func.func @transform_2(%arg0: i32) -> (i32, i32) {
    %c0_i32 = arith.constant 0 : i32
    %c0_i32_0 = arith.constant 0 : i32
    %c0_i32_1 = arith.constant 0 : i32
    return %c0_i32, %c0_i32_0 : i32, i32
  }
  func.func @transform_3(%arg0: i32) -> (i32, i32, i32) {
    %c0_i32 = arith.constant 0 : i32
    %c0_i32_0 = arith.constant 0 : i32
    %c0_i32_1 = arith.constant 0 : i32
    %c0_i32_2 = arith.constant 0 : i32
    return %c0_i32, %c0_i32_0, %c0_i32_1 : i32, i32, i32
  }
  func.func @transform_4(%arg0: i32) -> (i32, i32, i32) {
    %c0_i32 = arith.constant 0 : i32
    %c0_i32_0 = arith.constant 0 : i32
    %c0_i32_1 = arith.constant 0 : i32
    %c0_i32_2 = arith.constant 0 : i32
    return %c0_i32, %c0_i32_0, %c0_i32_1 : i32, i32, i32
  }
  func.func @transform_5(%arg0: i32) -> (i32, i32, i32) {
    %c0_i32 = arith.constant 0 : i32
    %c0_i32_0 = arith.constant 0 : i32
    %c0_i32_1 = arith.constant 0 : i32
    %c0_i32_2 = arith.constant 0 : i32
    return %c0_i32, %c0_i32_0, %c0_i32_1 : i32, i32, i32
  }
  func.func @transform_6(%arg0: i32) -> (i32, i32, i32) {
    %c0_i32 = arith.constant 0 : i32
    %c0_i32_0 = arith.constant 0 : i32
    %c0_i32_1 = arith.constant 0 : i32
    %c0_i32_2 = arith.constant 0 : i32
    return %c0_i32, %c0_i32_0, %c0_i32_1 : i32, i32, i32
  }
  func.func @transform_7(%arg0: i32) -> (i32, i32) {
    %c0_i32 = arith.constant 0 : i32
    %c0_i32_0 = arith.constant 0 : i32
    %c0_i32_1 = arith.constant 0 : i32
    return %c0_i32, %c0_i32_0 : i32, i32
  }
  func.func @transform_8(%arg0: i32) -> (i32, i32) {
    %c0_i32 = arith.constant 0 : i32
    %c0_i32_0 = arith.constant 0 : i32
    %c0_i32_1 = arith.constant 0 : i32
    return %c0_i32, %c0_i32_0 : i32, i32
  }
  func.func @transform_9(%arg0: i32) -> (i32, i32) {
    %c0_i32 = arith.constant 0 : i32
    %c0_i32_0 = arith.constant 0 : i32
    %c0_i32_1 = arith.constant 0 : i32
    return %c0_i32, %c0_i32_0 : i32, i32
  }
  func.func @transform_10(%arg0: i32) -> (i32, i32) {
    %c0_i32 = arith.constant 0 : i32
    %c0_i32_0 = arith.constant 0 : i32
    %c0_i32_1 = arith.constant 0 : i32
    return %c0_i32, %c0_i32_0 : i32, i32
  }
  func.func @transform_11(%arg0: i32) -> (i32, i32, i32) {
    %c0_i32 = arith.constant 0 : i32
    %c0_i32_0 = arith.constant 0 : i32
    %c0_i32_1 = arith.constant 0 : i32
    return %arg0, %c0_i32, %c0_i32_0 : i32, i32, i32
  }
}

</mosaic_0001>

<llo_original>
// kernel: tpu_custom_call.1
$region0: #{tpu_custom_call.1}
  #allocation0 [shape = 'u32[]', space=smem, size = 0x4, offset = 0x4, fixed_abs, tag = 'smem constant byte address 0x4 - core index']
  #allocation1 [shape = 'u32[144,128]{1,0:T(1,128)}', space=vmem, size = 0x12000, scoped, tag = 'internal scratch']
  #allocation2 [shape = 'f32[16,146]{1,0:T(8,128)}', space=vmem, size = 0x4000, scoped, tag = 'scratch operand']
  #allocation3 [shape = 'f32[64,16]{1,0:T(8,128)}', space=vmem, size = 0x8000, scoped, tag = 'scratch operand']
  %s0 = inlined_call_operand.hbm [shape: f32[2,8,16], index: 0, kind: input, shape index: {}]
  %s1 = inlined_call_operand.hbm [shape: bf16[16,8], index: 1, kind: input, shape index: {}]
  %s2 = inlined_call_operand.hbm [shape: f32[16,1], index: 2, kind: input, shape index: {}]
  %s3 = inlined_call_operand.hbm [shape: bf16[2,128,48], index: 3, kind: input, shape index: {}]
  %s4 = inlined_call_operand.hbm [shape: f32[2,128,1], index: 4, kind: input, shape index: {}]
  %s5 = inlined_call_operand.hbm [shape: bf16[2,80,64], index: 5, kind: input, shape index: {}]
  %s6 = inlined_call_operand.hbm [shape: f32[2,80,1], index: 6, kind: input, shape index: {}]
  %s7 = inlined_call_operand.hbm [shape: bf16[64,64], index: 7, kind: input, shape index: {}]
  %s8 = inlined_call_operand.hbm [shape: f32[64,1], index: 8, kind: input, shape index: {}]
  %s9 = inlined_call_operand.hbm [shape: bf16[12,64], index: 9, kind: input, shape index: {}]
  %s10 = inlined_call_operand.hbm [shape: f32[12,1], index: 10, kind: input, shape index: {}]
  %s11 = inlined_call_operand.hbm [shape: f32[2,12,16], index: 11, kind: output, shape index: {}]
  %s12 = sld [smem:[#allocation0]]
  $region121: #{tpu_custom_call.1} parent=0
    _
  %s14 = ssub.s32 1, %s12
  %s15 = scalar_select 0, %s14, %s12
  $region1: #{tpu_custom_call.1} parent=0
    #allocation4 [shape = 'u8[8192]{0}', space=vmem, size = 0x2000, scoped, tag = 'input window, operand 0']
    #allocation5 [shape = 's32[2]{0}', space=sflag, size = 0x8, scoped, tag = 'scoped memory for tpu_custom_call.1']
    #allocation6 [shape = 's32[2]{0}', space=sflag, size = 0x8, scoped, tag = 'scoped memory for tpu_custom_call.1']
    #allocation7 [shape = 'u8[4096]{0}', space=vmem, size = 0x1000, scoped, tag = 'input window, operand 1, single buffered']
    #allocation8 [shape = 's32[1]{0}', space=sflag, size = 0x4, scoped, tag = 'scoped memory for tpu_custom_call.1']
    #allocation9 [shape = 'u8[8192]{0}', space=vmem, size = 0x2000, scoped, tag = 'input window, operand 2, single buffered']
    #allocation10 [shape = 'u8[65536]{0}', space=vmem, size = 0x10000, scoped, tag = 'input window, operand 3, single buffered']
    #allocation11 [shape = 's32[1]{0}', space=sflag, size = 0x4, scoped, tag = 'scoped memory for tpu_custom_call.1']
    #allocation12 [shape = 'u8[131072]{0}', space=vmem, size = 0x20000, scoped, tag = 'input window, operand 4, single buffered']
    #allocation13 [shape = 'u8[40960]{0}', space=vmem, size = 0xa000, scoped, tag = 'input window, operand 5, single buffered']
    #allocation14 [shape = 's32[1]{0}', space=sflag, size = 0x4, scoped, tag = 'scoped memory for tpu_custom_call.1']
    #allocation15 [shape = 'u8[81920]{0}', space=vmem, size = 0x14000, scoped, tag = 'input window, operand 6, single buffered']
    #allocation16 [shape = 'u8[16384]{0}', space=vmem, size = 0x4000, scoped, tag = 'input window, operand 7, single buffered']
    #allocation17 [shape = 's32[1]{0}', space=sflag, size = 0x4, scoped, tag = 'scoped memory for tpu_custom_call.1']
    #allocation18 [shape = 'u8[32768]{0}', space=vmem, size = 0x8000, scoped, tag = 'input window, operand 8, single buffered']
    #allocation19 [shape = 'u8[4096]{0}', space=vmem, size = 0x1000, scoped, tag = 'input window, operand 9, single buffered']
    #allocation20 [shape = 's32[1]{0}', space=sflag, size = 0x4, scoped, tag = 'scoped memory for tpu_custom_call.1']
    #allocation21 [shape = 'u8[8192]{0}', space=vmem, size = 0x2000, scoped, tag = 'input window, operand 10, single buffered']
    #allocation22 [shape = 'u8[16384]{0}', space=vmem, size = 0x4000, scoped, tag = 'output window, operand 0']
    %16 = vsyncpa [#allocation5], 0
    %s17 = scalar_lea.sflag [#allocation5], 1
    %18 = vsyncpa %s17, 0
    %19 = vsyncpa [#allocation8], 0
    %20 = vsyncpa [#allocation11], 0
    %21 = vsyncpa [#allocation14], 0
    %22 = vsyncpa [#allocation17], 0
    %23 = vsyncpa [#allocation20], 0
    %24 = vsyncpa [#allocation6], 0
    %s25 = scalar_lea.sflag [#allocation6], 1
    %26 = vsyncpa %s25, 0
    loop: start=0, step=1, limit=4
    $region2: #{tpu_custom_call.1} parent=1 // loop_pre_header
      _
    $region3: #{tpu_custom_call.1} parent=1 // loop_header
      %s28 = sphi 0, %s32
      %p29 = scmp.ge.s32.totalorder %s28, 4
      %s38 = sphi 0, %s40
      %s41 = sphi 0, %s38
      %s42 = sphi 0, %s41
      %s58 = sphi 0, %s42
      %s62 = sphi 0, %s62
      %s64 = sphi 0, %s62
      %s65 = sphi 0, %s64
      %s79 = sphi 0, %s65
      %s83 = sphi 0, %s83
      %s85 = sphi 0, %s83
      %s86 = sphi 0, %s85
      %s100 = sphi 0, %s86
      %s104 = sphi 0, %s104
      %s106 = sphi 0, %s104
      %s107 = sphi 0, %s106
      %s121 = sphi 0, %s107
      %s125 = sphi 0, %s125
      %s127 = sphi 0, %s125
      %s128 = sphi 0, %s127
      %s142 = sphi 0, %s128
      %s146 = sphi 0, %s146
      %s148 = sphi 0, %s146
      %s149 = sphi 0, %s148
      %s163 = sphi 0, %s149
      %s167 = sphi 0, %s167
      %s169 = sphi 0, %s167
      %s170 = sphi 0, %s169
      %s184 = sphi 0, %s170
      %s188 = sphi 0, %s188
      %s190 = sphi 0, %s188
      %s191 = sphi 0, %s190
      %s205 = sphi 0, %s191
      %s209 = sphi 0, %s209
      %s211 = sphi 0, %s209
      %s212 = sphi 0, %s211
      %s226 = sphi 0, %s212
      %s230 = sphi 0, %s230
      %s232 = sphi 0, %s230
      %s233 = sphi 0, %s232
      %s247 = sphi 0, %s233
      %s251 = sphi 0, %s251
      %s253 = sphi 0, %s251
      %s254 = sphi 0, %s253
      %s268 = sphi 0, %s254
      %s274 = sphi 0, %s276
      %s277 = sphi 0, %s274
      %s278 = sphi 0, %s277
      %s294 = sphi 0, %s278
    $region4: #{tpu_custom_call.1} parent=1 // loop_header_branch
      %31 = sbr.rel (%p29) target = $region8
    $region5: #{tpu_custom_call.1} parent=1 // loop_body
      %s33 = ssub.s32 %s28, 1
      %s34 = ssub.s32 %s28, 2
      %s35 = sadd.s32 %s28, 1
      %s36 = ssub.s32 %s28, %s35
      %p37 = scmp.eq.s32.totalorder %s36, 0
      %s39 = sadd.s32 %s38, 1
      %s40 = scalar_select %p37, %s38, %s39
      %p43 = pneg %p37
      %p44 = scmp.eq.s32.totalorder %s28, 1
      %p45 = por %p43, %p44
      %p46 = scmp.ne.s32.totalorder %s38, %s41
      %p47 = scmp.eq.s32.totalorder %s28, 0
      %p48 = por %p46, %p47
      %p49 = scmp.ne.s32.totalorder %s38, %s41
      %p50 = scmp.eq.s32.totalorder %s33, 1
      %p51 = por %p49, %p50
      %p52 = scmp.ne.s32.totalorder %s41, %s42
      %p53 = scmp.eq.s32.totalorder %s33, 0
      %p54 = por %p52, %p53
      %p55 = scmp.ne.s32.totalorder %s41, %s42
      %p56 = scmp.eq.s32.totalorder %s34, 1
      %p57 = por %p55, %p56
      %p59 = scmp.ne.s32.totalorder %s42, %s58
      %p60 = scmp.eq.s32.totalorder %s34, 0
      %p61 = por %p59, %p60
      %s63 = sadd.s32 %s62, 1
      %p66 = scmp.eq.s32.totalorder %s28, 1
      %p67 = scmp.ne.s32.totalorder %s62, %s64
      %p68 = scmp.eq.s32.totalorder %s28, 0
      %p69 = por %p67, %p68
      %p70 = scmp.ne.s32.totalorder %s62, %s64
      %p71 = scmp.eq.s32.totalorder %s33, 1
      %p72 = por %p70, %p71
      %p73 = scmp.ne.s32.totalorder %s64, %s65
      %p74 = scmp.eq.s32.totalorder %s33, 0
      %p75 = por %p73, %p74
      %p76 = scmp.ne.s32.totalorder %s64, %s65
      %p77 = scmp.eq.s32.totalorder %s34, 1
      %p78 = por %p76, %p77
      %p80 = scmp.ne.s32.totalorder %s65, %s79
      %p81 = scmp.eq.s32.totalorder %s34, 0
      %p82 = por %p80, %p81
      %s84 = sadd.s32 %s83, 1
      %p87 = scmp.eq.s32.totalorder %s28, 1
      %p88 = scmp.ne.s32.totalorder %s83, %s85
      %p89 = scmp.eq.s32.totalorder %s28, 0
      %p90 = por %p88, %p89
      %p91 = scmp.ne.s32.totalorder %s83, %s85
      %p92 = scmp.eq.s32.totalorder %s33, 1
      %p93 = por %p91, %p92
      %p94 = scmp.ne.s32.totalorder %s85, %s86
      %p95 = scmp.eq.s32.totalorder %s33, 0
      %p96 = por %p94, %p95
      %p97 = scmp.ne.s32.totalorder %s85, %s86
      %p98 = scmp.eq.s32.totalorder %s34, 1
      %p99 = por %p97, %p98
      %p101 = scmp.ne.s32.totalorder %s86, %s100
      %p102 = scmp.eq.s32.totalorder %s34, 0
      %p103 = por %p101, %p102
      %s105 = sadd.s32 %s104, 1
      %p108 = scmp.eq.s32.totalorder %s28, 1
      %p109 = scmp.ne.s32.totalorder %s104, %s106
      %p110 = scmp.eq.s32.totalorder %s28, 0
      %p111 = por %p109, %p110
      %p112 = scmp.ne.s32.totalorder %s104, %s106
      %p113 = scmp.eq.s32.totalorder %s33, 1
      %p114 = por %p112, %p113
      %p115 = scmp.ne.s32.totalorder %s106, %s107
      %p116 = scmp.eq.s32.totalorder %s33, 0
      %p117 = por %p115, %p116
      %p118 = scmp.ne.s32.totalorder %s106, %s107
      %p119 = scmp.eq.s32.totalorder %s34, 1
      %p120 = por %p118, %p119
      %p122 = scmp.ne.s32.totalorder %s107, %s121
      %p123 = scmp.eq.s32.totalorder %s34, 0
      %p124 = por %p122, %p123
      %s126 = sadd.s32 %s125, 1
      %p129 = scmp.eq.s32.totalorder %s28, 1
      %p130 = scmp.ne.s32.totalorder %s125, %s127
      %p131 = scmp.eq.s32.totalorder %s28, 0
      %p132 = por %p130, %p131
      %p133 = scmp.ne.s32.totalorder %s125, %s127
      %p134 = scmp.eq.s32.totalorder %s33, 1
      %p135 = por %p133, %p134
      %p136 = scmp.ne.s32.totalorder %s127, %s128
      %p137 = scmp.eq.s32.totalorder %s33, 0
      %p138 = por %p136, %p137
      %p139 = scmp.ne.s32.totalorder %s127, %s128
      %p140 = scmp.eq.s32.totalorder %s34, 1
      %p141 = por %p139, %p140
      %p143 = scmp.ne.s32.totalorder %s128, %s142
      %p144 = scmp.eq.s32.totalorder %s34, 0
      %p145 = por %p143, %p144
      %s147 = sadd.s32 %s146, 1
      %p150 = scmp.eq.s32.totalorder %s28, 1
      %p151 = scmp.ne.s32.totalorder %s146, %s148
      %p152 = scmp.eq.s32.totalorder %s28, 0
      %p153 = por %p151, %p152
      %p154 = scmp.ne.s32.totalorder %s146, %s148
      %p155 = scmp.eq.s32.totalorder %s33, 1
      %p156 = por %p154, %p155
      %p157 = scmp.ne.s32.totalorder %s148, %s149
      %p158 = scmp.eq.s32.totalorder %s33, 0
      %p159 = por %p157, %p158
      %p160 = scmp.ne.s32.totalorder %s148, %s149
      %p161 = scmp.eq.s32.totalorder %s34, 1
      %p162 = por %p160, %p161
      %p164 = scmp.ne.s32.totalorder %s149, %s163
      %p165 = scmp.eq.s32.totalorder %s34, 0
      %p166 = por %p164, %p165
      %s168 = sadd.s32 %s167, 1
      %p171 = scmp.eq.s32.totalorder %s28, 1
      %p172 = scmp.ne.s32.totalorder %s167, %s169
      %p173 = scmp.eq.s32.totalorder %s28, 0
      %p174 = por %p172, %p173
      %p175 = scmp.ne.s32.totalorder %s167, %s169
      %p176 = scmp.eq.s32.totalorder %s33, 1
      %p177 = por %p175, %p176
      %p178 = scmp.ne.s32.totalorder %s169, %s170
      %p179 = scmp.eq.s32.totalorder %s33, 0
      %p180 = por %p178, %p179
      %p181 = scmp.ne.s32.totalorder %s169, %s170
      %p182 = scmp.eq.s32.totalorder %s34, 1
      %p183 = por %p181, %p182
      %p185 = scmp.ne.s32.totalorder %s170, %s184
      %p186 = scmp.eq.s32.totalorder %s34, 0
      %p187 = por %p185, %p186
      %s189 = sadd.s32 %s188, 1
      %p192 = scmp.eq.s32.totalorder %s28, 1
      %p193 = scmp.ne.s32.totalorder %s188, %s190
      %p194 = scmp.eq.s32.totalorder %s28, 0
      %p195 = por %p193, %p194
      %p196 = scmp.ne.s32.totalorder %s188, %s190
      %p197 = scmp.eq.s32.totalorder %s33, 1
      %p198 = por %p196, %p197
      %p199 = scmp.ne.s32.totalorder %s190, %s191
      %p200 = scmp.eq.s32.totalorder %s33, 0
      %p201 = por %p199, %p200
      %p202 = scmp.ne.s32.totalorder %s190, %s191
      %p203 = scmp.eq.s32.totalorder %s34, 1
      %p204 = por %p202, %p203
      %p206 = scmp.ne.s32.totalorder %s191, %s205
      %p207 = scmp.eq.s32.totalorder %s34, 0
      %p208 = por %p206, %p207
      %s210 = sadd.s32 %s209, 1
      %p213 = scmp.eq.s32.totalorder %s28, 1
      %p214 = scmp.ne.s32.totalorder %s209, %s211
      %p215 = scmp.eq.s32.totalorder %s28, 0
      %p216 = por %p214, %p215
      %p217 = scmp.ne.s32.totalorder %s209, %s211
      %p218 = scmp.eq.s32.totalorder %s33, 1
      %p219 = por %p217, %p218
      %p220 = scmp.ne.s32.totalorder %s211, %s212
      %p221 = scmp.eq.s32.totalorder %s33, 0
      %p222 = por %p220, %p221
      %p223 = scmp.ne.s32.totalorder %s211, %s212
      %p224 = scmp.eq.s32.totalorder %s34, 1
      %p225 = por %p223, %p224
      %p227 = scmp.ne.s32.totalorder %s212, %s226
      %p228 = scmp.eq.s32.totalorder %s34, 0
      %p229 = por %p227, %p228
      %s231 = sadd.s32 %s230, 1
      %p234 = scmp.eq.s32.totalorder %s28, 1
      %p235 = scmp.ne.s32.totalorder %s230, %s232
      %p236 = scmp.eq.s32.totalorder %s28, 0
      %p237 = por %p235, %p236
      %p238 = scmp.ne.s32.totalorder %s230, %s232
      %p239 = scmp.eq.s32.totalorder %s33, 1
      %p240 = por %p238, %p239
      %p241 = scmp.ne.s32.totalorder %s232, %s233
      %p242 = scmp.eq.s32.totalorder %s33, 0
      %p243 = por %p241, %p242
      %p244 = scmp.ne.s32.totalorder %s232, %s233
      %p245 = scmp.eq.s32.totalorder %s34, 1
      %p246 = por %p244, %p245
      %p248 = scmp.ne.s32.totalorder %s233, %s247
      %p249 = scmp.eq.s32.totalorder %s34, 0
      %p250 = por %p248, %p249
      %s252 = sadd.s32 %s251, 1
      %p255 = scmp.eq.s32.totalorder %s28, 1
      %p256 = scmp.ne.s32.totalorder %s251, %s253
      %p257 = scmp.eq.s32.totalorder %s28, 0
      %p258 = por %p256, %p257
      %p259 = scmp.ne.s32.totalorder %s251, %s253
      %p260 = scmp.eq.s32.totalorder %s33, 1
      %p261 = por %p259, %p260
      %p262 = scmp.ne.s32.totalorder %s253, %s254
      %p263 = scmp.eq.s32.totalorder %s33, 0
      %p264 = por %p262, %p263
      %p265 = scmp.ne.s32.totalorder %s253, %s254
      %p266 = scmp.eq.s32.totalorder %s34, 1
      %p267 = por %p265, %p266
      %p269 = scmp.ne.s32.totalorder %s254, %s268
      %p270 = scmp.eq.s32.totalorder %s34, 0
      %p271 = por %p269, %p270
      %s272 = ssub.s32 %s28, %s35
      %p273 = scmp.eq.s32.totalorder %s272, 0
      %s275 = sadd.s32 %s274, 1
      %s276 = scalar_select %p273, %s274, %s275
      %p279 = pneg %p273
      %p280 = scmp.eq.s32.totalorder %s28, 1
      %p281 = por %p279, %p280
      %p282 = scmp.ne.s32.totalorder %s274, %s277
      %p283 = scmp.eq.s32.totalorder %s28, 0
      %p284 = por %p282, %p283
      %p285 = scmp.ne.s32.totalorder %s274, %s277
      %p286 = scmp.eq.s32.totalorder %s33, 1
      %p287 = por %p285, %p286
      %p288 = scmp.ne.s32.totalorder %s277, %s278
      %p289 = scmp.eq.s32.totalorder %s33, 0
      %p290 = por %p288, %p289
      %p291 = scmp.ne.s32.totalorder %s277, %s278
      %p292 = scmp.eq.s32.totalorder %s34, 1
      %p293 = por %p291, %p292
      %p295 = scmp.ne.s32.totalorder %s278, %s294
      %p296 = scmp.eq.s32.totalorder %s34, 0
      %p297 = por %p295, %p296
      %p298 = scmp.le.s32.totalorder 1, %s28
      %p299 = scmp.lt.s32.totalorder %s28, 3
      %p300 = pnand %p298, %p299
      %p301 = pneg %p300
      // Predicated region
      $region9: #{tpu_custom_call.1} parent=5 // pred_check
        _
      $region10: #{tpu_custom_call.1} parent=5 // pred_check_branch
        %303 = sbr.rel (%p300) target = $region12
      $region11: #{tpu_custom_call.1} parent=5 // pred_region
        %s304 = ssub.s32 %s28, 1
        // Predicated region
        $region13: #{tpu_custom_call.1} parent=11 // pred_check
          %p305 = pneg %p75
        $region14: #{tpu_custom_call.1} parent=11 // pred_check_branch
          %307 = sbr.rel (%p305) target = $region16
        $region15: #{tpu_custom_call.1} parent=11 // pred_region
          %s309 = ssub.s32 128, 128
          %310 = vsyncadd [#allocation8], %s309
          %s311 = sshll.u32 [#allocation7], 4
          %s312 = int_to_ptr.vmem [resolvable:$true] %s311
          %317 = dma.hbm_to_vmem [thread:$0]  %s1, 128, %s312, [#allocation8], 64, 64, 4
        $region16: #{tpu_custom_call.1} parent=11 // pred_fallthru
          _
        // Predicated region
        $region17: #{tpu_custom_call.1} parent=11 // pred_check
          %p318 = pneg %p96
        $region18: #{tpu_custom_call.1} parent=11 // pred_check_branch
          %320 = sbr.rel (%p318) target = $region20
        $region19: #{tpu_custom_call.1} parent=11 // pred_region
          %s322 = ssub.s32 256, 256
          %323 = vsyncadd [#allocation8], %s322
          %s324 = sshll.u32 [#allocation9], 4
          %s325 = int_to_ptr.vmem [resolvable:$true] %s324
          %330 = dma.hbm_to_vmem [thread:$0]  %s2, 256, %s325, [#allocation8], 128, 128, 8
        $region20: #{tpu_custom_call.1} parent=11 // pred_fallthru
          _
        // Predicated region
        $region21: #{tpu_custom_call.1} parent=11 // pred_check
          %p331 = pneg %p117
        $region22: #{tpu_custom_call.1} parent=11 // pred_check_branch
          %333 = sbr.rel (%p331) target = $region24
        $region23: #{tpu_custom_call.1} parent=11 // pred_region
          %s335 = ssub.s32 2048, 2048
          %336 = vsyncadd [#allocation11], %s335
          %s337 = sshll.u32 [#allocation10], 4
          %s338 = int_to_ptr.vmem [resolvable:$true] %s337
          %343 = dma.hbm_to_vmem [thread:$0]  %s3, 2048, %s338, [#allocation11], 64, 64, 4
        $region24: #{tpu_custom_call.1} parent=11 // pred_fallthru
          _
        // Predicated region
        $region25: #{tpu_custom_call.1} parent=11 // pred_check
          %p344 = pneg %p138
        $region26: #{tpu_custom_call.1} parent=11 // pred_check_branch
          %346 = sbr.rel (%p344) target = $region28
        $region27: #{tpu_custom_call.1} parent=11 // pred_region
          %s348 = ssub.s32 4096, 4096
          %349 = vsyncadd [#allocation11], %s348
          %s350 = sshll.u32 [#allocation12], 4
          %s351 = int_to_ptr.vmem [resolvable:$true] %s350
          %356 = dma.hbm_to_vmem [thread:$0]  %s4, 4096, %s351, [#allocation11], 128, 128, 8
        $region28: #{tpu_custom_call.1} parent=11 // pred_fallthru
          _
        // Predicated region
        $region29: #{tpu_custom_call.1} parent=11 // pred_check
          %p357 = pneg %p159
        $region30: #{tpu_custom_call.1} parent=11 // pred_check_branch
          %359 = sbr.rel (%p357) target = $region32
        $region31: #{tpu_custom_call.1} parent=11 // pred_region
          %s361 = ssub.s32 1280, 1280
          %362 = vsyncadd [#allocation14], %s361
          %s363 = sshll.u32 [#allocation13], 4
          %s364 = int_to_ptr.vmem [resolvable:$true] %s363
          %369 = dma.hbm_to_vmem [thread:$0]  %s5, 1280, %s364, [#allocation14], 64, 64, 4
        $region32: #{tpu_custom_call.1} parent=11 // pred_fallthru
          _
        // Predicated region
        $region33: #{tpu_custom_call.1} parent=11 // pred_check
          %p370 = pneg %p180
        $region34: #{tpu_custom_call.1} parent=11 // pred_check_branch
          %372 = sbr.rel (%p370) target = $region36
        $region35: #{tpu_custom_call.1} parent=11 // pred_region
          %s374 = ssub.s32 2560, 2560
          %375 = vsyncadd [#allocation14], %s374
          %s376 = sshll.u32 [#allocation15], 4
          %s377 = int_to_ptr.vmem [resolvable:$true] %s376
          %382 = dma.hbm_to_vmem [thread:$0]  %s6, 2560, %s377, [#allocation14], 128, 128, 8
        $region36: #{tpu_custom_call.1} parent=11 // pred_fallthru
          _
        // Predicated region
        $region37: #{tpu_custom_call.1} parent=11 // pred_check
          %p383 = pneg %p201
        $region38: #{tpu_custom_call.1} parent=11 // pred_check_branch
          %385 = sbr.rel (%p383) target = $region40
        $region39: #{tpu_custom_call.1} parent=11 // pred_region
          %s387 = ssub.s32 512, 512
          %388 = vsyncadd [#allocation17], %s387
          %s389 = sshll.u32 [#allocation16], 4
          %s390 = int_to_ptr.vmem [resolvable:$true] %s389
          %395 = dma.hbm_to_vmem [thread:$0]  %s7, 512, %s390, [#allocation17], 64, 64, 4
        $region40: #{tpu_custom_call.1} parent=11 // pred_fallthru
          _
        // Predicated region
        $region41: #{tpu_custom_call.1} parent=11 // pred_check
          %p396 = pneg %p222
        $region42: #{tpu_custom_call.1} parent=11 // pred_check_branch
          %398 = sbr.rel (%p396) target = $region44
        $region43: #{tpu_custom_call.1} parent=11 // pred_region
          %s400 = ssub.s32 1024, 1024
          %401 = vsyncadd [#allocation17], %s400
          %s402 = sshll.u32 [#allocation18], 4
          %s403 = int_to_ptr.vmem [resolvable:$true] %s402
          %408 = dma.hbm_to_vmem [thread:$0]  %s8, 1024, %s403, [#allocation17], 128, 128, 8
        $region44: #{tpu_custom_call.1} parent=11 // pred_fallthru
          _
        // Predicated region
        $region45: #{tpu_custom_call.1} parent=11 // pred_check
          %p409 = pneg %p243
        $region46: #{tpu_custom_call.1} parent=11 // pred_check_branch
          %411 = sbr.rel (%p409) target = $region48
        $region47: #{tpu_custom_call.1} parent=11 // pred_region
          %s413 = ssub.s32 128, 128
          %414 = vsyncadd [#allocation20], %s413
          %s415 = sshll.u32 [#allocation19], 4
          %s416 = int_to_ptr.vmem [resolvable:$true] %s415
          %421 = dma.hbm_to_vmem [thread:$0]  %s9, 128, %s416, [#allocation20], 64, 64, 4
        $region48: #{tpu_custom_call.1} parent=11 // pred_fallthru
          _
        // Predicated region
        $region49: #{tpu_custom_call.1} parent=11 // pred_check
          %p422 = pneg %p264
        $region50: #{tpu_custom_call.1} parent=11 // pred_check_branch
          %424 = sbr.rel (%p422) target = $region52
        $region51: #{tpu_custom_call.1} parent=11 // pred_region
          %s426 = ssub.s32 256, 256
          %427 = vsyncadd [#allocation20], %s426
          %s428 = sshll.u32 [#allocation21], 4
          %s429 = int_to_ptr.vmem [resolvable:$true] %s428
          %434 = dma.hbm_to_vmem [thread:$0]  %s10, 256, %s429, [#allocation20], 128, 128, 8
        $region52: #{tpu_custom_call.1} parent=11 // pred_fallthru
          _
      $region12: #{tpu_custom_call.1} parent=5 // pred_fallthru
        _
      %p435 = scmp.lt.s32.totalorder %s28, 2
      // Predicated region
      $region53: #{tpu_custom_call.1} parent=5 // pred_check
        %p436 = pneg %p435
      $region54: #{tpu_custom_call.1} parent=5 // pred_check_branch
        %438 = sbr.rel (%p436) target = $region56
      $region55: #{tpu_custom_call.1} parent=5 // pred_region
        // Predicated region
        $region57: #{tpu_custom_call.1} parent=55 // pred_check
          %p439 = pneg %p48
        $region58: #{tpu_custom_call.1} parent=55 // pred_check_branch
          %441 = sbr.rel (%p439) target = $region60
        $region59: #{tpu_custom_call.1} parent=55 // pred_region
          %s442 = sand.u32 %s38, 1
          %s443 = scalar_lea.sflag [#allocation5], %s442
          %s444 = sand.u32 %s38, 1
          %s445 = smul.addr %s444, 8
          %s446 = scalar_lea.vmem [#allocation4], %s445
          %s448 = ssub.s32 128, 128
          %449 = vsyncadd %s443, %s448
          %s450 = smul.addr %s28, 128
          %s451 = scalar_lea.hbm %s0, %s450
          %s453 = sshll.u32 %s446, 4
          %s454 = int_to_ptr.vmem [resolvable:$true] %s453
          %456 = dma.hbm_to_vmem [thread:$0]  %s451, 128, %s454, %s443
        $region60: #{tpu_custom_call.1} parent=55 // pred_fallthru
          _
      $region56: #{tpu_custom_call.1} parent=5 // pred_fallthru
        _
      %p457 = scmp.le.s32.totalorder 1, %s28
      %p458 = scmp.lt.s32.totalorder %s28, 3
      %p459 = pnand %p457, %p458
      %p460 = pneg %p459
      // Predicated region
      $region61: #{tpu_custom_call.1} parent=5 // pred_check
        _
      $region62: #{tpu_custom_call.1} parent=5 // pred_check_branch
        %462 = sbr.rel (%p459) target = $region64
      $region63: #{tpu_custom_call.1} parent=5 // pred_region
        %s463 = ssub.s32 %s28, 1
        %s464 = sand.u32 %s41, 1
        %s465 = scalar_lea.sflag [#allocation5], %s464
        %s466 = sand.u32 %s41, 1
        %s467 = smul.addr %s466, 8
        %s468 = scalar_lea.vmem [#allocation4], %s467
        // Predicated region
        $region65: #{tpu_custom_call.1} parent=63 // pred_check
          %p469 = pneg %p54
        $region66: #{tpu_custom_call.1} parent=63 // pred_check_branch
          %471 = sbr.rel (%p469) target = $region68
        $region67: #{tpu_custom_call.1} parent=63 // pred_region
          %472 = dma.done %s465, 128
        $region68: #{tpu_custom_call.1} parent=63 // pred_fallthru
          _
        // Predicated region
        $region69: #{tpu_custom_call.1} parent=63 // pred_check
          %p473 = pneg %p75
        $region70: #{tpu_custom_call.1} parent=63 // pred_check_branch
          %475 = sbr.rel (%p473) target = $region72
        $region71: #{tpu_custom_call.1} parent=63 // pred_region
          %476 = dma.done [#allocation8], 128
        $region72: #{tpu_custom_call.1} parent=63 // pred_fallthru
          _
        // Predicated region
        $region73: #{tpu_custom_call.1} parent=63 // pred_check
          %p477 = pneg %p96
        $region74: #{tpu_custom_call.1} parent=63 // pred_check_branch
          %479 = sbr.rel (%p477) target = $region76
        $region75: #{tpu_custom_call.1} parent=63 // pred_region
          %480 = dma.done [#allocation8], 256
        $region76: #{tpu_custom_call.1} parent=63 // pred_fallthru
          _
        // Predicated region
        $region77: #{tpu_custom_call.1} parent=63 // pred_check
          %p481 = pneg %p117
        $region78: #{tpu_custom_call.1} parent=63 // pred_check_branch
          %483 = sbr.rel (%p481) target = $region80
        $region79: #{tpu_custom_call.1} parent=63 // pred_region
          %484 = dma.done [#allocation11], 2048
        $region80: #{tpu_custom_call.1} parent=63 // pred_fallthru
          _
        // Predicated region
        $region81: #{tpu_custom_call.1} parent=63 // pred_check
          %p485 = pneg %p138
        $region82: #{tpu_custom_call.1} parent=63 // pred_check_branch
          %487 = sbr.rel (%p485) target = $region84
        $region83: #{tpu_custom_call.1} parent=63 // pred_region
          %488 = dma.done [#allocation11], 4096
        $region84: #{tpu_custom_call.1} parent=63 // pred_fallthru
          _
        // Predicated region
        $region85: #{tpu_custom_call.1} parent=63 // pred_check
          %p489 = pneg %p159
        $region86: #{tpu_custom_call.1} parent=63 // pred_check_branch
          %491 = sbr.rel (%p489) target = $region88
        $region87: #{tpu_custom_call.1} parent=63 // pred_region
          %492 = dma.done [#allocation14], 1280
        $region88: #{tpu_custom_call.1} parent=63 // pred_fallthru
          _
        // Predicated region
        $region89: #{tpu_custom_call.1} parent=63 // pred_check
          %p493 = pneg %p180
        $region90: #{tpu_custom_call.1} parent=63 // pred_check_branch
          %495 = sbr.rel (%p493) target = $region92
        $region91: #{tpu_custom_call.1} parent=63 // pred_region
          %496 = dma.done [#allocation14], 2560
        $region92: #{tpu_custom_call.1} parent=63 // pred_fallthru
          _
        // Predicated region
        $region93: #{tpu_custom_call.1} parent=63 // pred_check
          %p497 = pneg %p201
        $region94: #{tpu_custom_call.1} parent=63 // pred_check_branch
          %499 = sbr.rel (%p497) target = $region96
        $region95: #{tpu_custom_call.1} parent=63 // pred_region
          %500 = dma.done [#allocation17], 512
        $region96: #{tpu_custom_call.1} parent=63 // pred_fallthru
          _
        // Predicated region
        $region97: #{tpu_custom_call.1} parent=63 // pred_check
          %p501 = pneg %p222
        $region98: #{tpu_custom_call.1} parent=63 // pred_check_branch
          %503 = sbr.rel (%p501) target = $region100
        $region99: #{tpu_custom_call.1} parent=63 // pred_region
          %504 = dma.done [#allocation17], 1024
        $region100: #{tpu_custom_call.1} parent=63 // pred_fallthru
          _
        // Predicated region
        $region101: #{tpu_custom_call.1} parent=63 // pred_check
          %p505 = pneg %p243
        $region102: #{tpu_custom_call.1} parent=63 // pred_check_branch
          %507 = sbr.rel (%p505) target = $region104
        $region103: #{tpu_custom_call.1} parent=63 // pred_region
          %508 = dma.done [#allocation20], 128
        $region104: #{tpu_custom_call.1} parent=63 // pred_fallthru
          _
        // Predicated region
        $region105: #{tpu_custom_call.1} parent=63 // pred_check
          %p509 = pneg %p264
        $region106: #{tpu_custom_call.1} parent=63 // pred_check_branch
          %511 = sbr.rel (%p509) target = $region108
        $region107: #{tpu_custom_call.1} parent=63 // pred_region
          %512 = dma.done [#allocation20], 256
        $region108: #{tpu_custom_call.1} parent=63 // pred_fallthru
          _
        %s513 = sand.u32 %s41, 1
        %s514 = scalar_lea.sflag [#allocation5], %s513
        %s515 = sand.u32 %s41, 1
        %s516 = smul.addr %s515, 8
        %s517 = scalar_lea.vmem [#allocation4], %s516
        %p518 = pneg %p54
        %p519 = pneg %p51
        %p520 = pneg %p75
        %p521 = pneg %p72
        %p522 = pneg %p96
        %p523 = pneg %p93
        %p524 = pneg %p117
        %p525 = pneg %p114
        %p526 = pneg %p138
        %p527 = pneg %p135
        %p528 = pneg %p159
        %p529 = pneg %p156
        %p530 = pneg %p180
        %p531 = pneg %p177
        %p532 = pneg %p201
        %p533 = pneg %p198
        %p534 = pneg %p222
        %p535 = pneg %p219
        %p536 = pneg %p243
        %p537 = pneg %p240
        %p538 = pneg %p264
        %p539 = pneg %p261
        %p540 = pneg %p290
        %p541 = pneg %p287
        %s542 = sand.u32 %s277, 1
        %s543 = scalar_lea.sflag [#allocation6], %s542
        %s544 = sand.u32 %s277, 1
        %s545 = smul.addr %s544, 16
        %s546 = scalar_lea.vmem [#allocation22], %s545
        %548 = vst [vmem:[#allocation2] sm:$0xff] 0.0
        %549 = vst [vmem:[#allocation2 + $0x10] sm:$0xff] 0.0
        %vm550 = vcmask 146560
        %551 = vst.msk [vmem:[#allocation2 + $0x8] sm:$0xff] %vm550, 0.0
        %552 = vst.msk [vmem:[#allocation2 + $0x18] sm:$0xff] %vm550, 0.0
        %v553 = vld [vmem:[#allocation7] sm:$0xf]
        %v554 = vld [vmem:[#allocation7 + $0x4] sm:$0xf]
        %v555 = vld [vmem:[%s468] sm:$0xff]
        %v556 = vpack.c.bf16 %v555, %v555
        %v557 = vld [vmem:[#allocation9] sm:$0xff]
        %v558 = vld [vmem:[#allocation9 + $0x8] sm:$0xff]
        %560 = vset.pattern.permute.xlu0 0
        %561 = vperm.xlu0 %560, %v557
        %v562 = vpop.permute.xlu0 %561
        %565 = vset.pattern.permute.xlu0 0
        %566 = vperm.xlu0 %565, %v558
        %v567 = vpop.permute.xlu0 %566
        %v571 = vunpack.c.l.b16 %v553
        %v572 = vunpack.c.l.b16 %v554
        %v573 = vpack.c.b16 %v572, %v571
        %vm574 = vcmask 64512
        %v576 = vsel %vm574, %v573, 0
        %vm578 = vcmask 1043456
        %v580 = vsel %vm578, %v556, 0
        %582 = vmatprep.subr.bf16.mxu0 0
        %583 = vmatpush1.bf16.msra.mxu0 %v580
        %584 = vmatprep.subr.bf16.mxu0 0
        %585 = vmatpush1.bf16.msra.mxu0 0
        %586 = vmatprep.subr.bf16.mxu0 0
        %587 = vmatpush1.bf16.msra.mxu0 0
        %588 = vmatprep.subr.bf16.mxu0 0
        %589 = vmatpush1.bf16.msra.mxu0 0
        %590 = vmatprep.subr.bf16.mxu0 0
        %591 = vmatpush1.bf16.msra.mxu0 0
        %592 = vmatprep.subr.bf16.mxu0 0
        %593 = vmatpush1.bf16.msra.mxu0 0
        %594 = vmatprep.subr.bf16.mxu0 0
        %595 = vmatpush1.bf16.msra.mxu0 0
        %596 = vmatprep.subr.bf16.mxu0 0
        %597 = vmatpush1.bf16.msra.mxu0 0
        %598 = vmatprep.subr.bf16.mxu0 0
        %599 = vmatpush1.bf16.msra.mxu0 0
        %600 = vmatprep.subr.bf16.mxu0 0
        %601 = vmatpush1.bf16.msra.mxu0 0
        %602 = vmatprep.subr.bf16.mxu0 0
        %603 = vmatpush1.bf16.msra.mxu0 0
        %604 = vmatprep.subr.bf16.mxu0 0
        %605 = vmatpush1.bf16.msra.mxu0 0
        %606 = vmatprep.subr.bf16.mxu0 0
        %607 = vmatpush1.bf16.msra.mxu0 0
        %608 = vmatprep.subr.bf16.mxu0 0
        %609 = vmatpush1.bf16.msra.mxu0 0
        %610 = vmatprep.subr.bf16.mxu0 0
        %611 = vmatpush1.bf16.msra.mxu0 0
        %612 = vmatprep.subr.bf16.mxu0 0
        %613 = vmatpush1.bf16.msra.mxu0 0
        %614 = vmatprep.mubr.bf16.mxu0 0
        %615 = vmatmul.mubr.bf16.gmra.mrb[0].mxu0 %v576
        %v616 = vpop.f32.mrb[0].mxu0
        %v617 = vadd.f32 %v562, %v616
        %v618 = vpop.f32.mrb[0].mxu0
        %v619 = vpop.f32.mrb[0].mxu0
        %v620 = vadd.f32 %v567, %v619
        %v621 = vpop.f32.mrb[0].mxu0
        %622 = vdwg.mxu0
        %vm623 = vcmask 130048
        %624 = vst.msk [vmem:[#allocation2 + $0x8] sm:$0xff] %vm623, %v617
        %625 = vst.msk [vmem:[#allocation2 + $0x18] sm:$0xff] %vm623, %v620
        %626 = vst.msk [vmem:[#allocation3] sm:$0xff] %vm623, 0.0
        %627 = vst.msk [vmem:[#allocation3 + $0x8] sm:$0xff] %vm623, 0.0
        %628 = vst.msk [vmem:[#allocation3 + $0x10] sm:$0xff] %vm623, 0.0
        %629 = vst.msk [vmem:[#allocation3 + $0x18] sm:$0xff] %vm623, 0.0
        %630 = vst.msk [vmem:[#allocation3 + $0x20] sm:$0xff] %vm623, 0.0
        %631 = vst.msk [vmem:[#allocation3 + $0x28] sm:$0xff] %vm623, 0.0
        %632 = vst.msk [vmem:[#allocation3 + $0x30] sm:$0xff] %vm623, 0.0
        %633 = vst.msk [vmem:[#allocation3 + $0x38] sm:$0xff] %vm623, 0.0
        %v634 = vld [vmem:[#allocation2] sm:$0xff]
        %v635 = vld [vmem:[#allocation2 + $0x8] sm:$0xff]
        %v636 = vld [vmem:[#allocation2 + $0x10] sm:$0xff]
        %v637 = vld [vmem:[#allocation2 + $0x18] sm:$0xff]
        %640 = vrot.lane.b32.xlu0 %v635, 127
        %v641 = vpop.permute.xlu0 %640
        %642 = vrot.lane.b32.xlu0 %v637, 127
        %v643 = vpop.permute.xlu0 %642
        %646 = vrot.lane.b32.xlu0 %v635, 126
        %v647 = vpop.permute.xlu0 %646
        %648 = vrot.lane.b32.xlu0 %v637, 126
        %v649 = vpop.permute.xlu0 %648
        %v652 = vpack.c.bf16 %v636, %v634
        %v653 = vpack.c.bf16 %v637, %v635
        %v654 = vpack.c.bf16 %v643, %v641
        %v655 = vpack.c.bf16 %v649, %v647
        %v656 = vld [vmem:[#allocation10] sm:$0xf]
        %v657 = vld [vmem:[#allocation10 + $0x4] sm:$0xf]
        %v658 = vld [vmem:[#allocation10 + $0x8] sm:$0xf]
        %v659 = vld [vmem:[#allocation10 + $0xc] sm:$0xf]
        %v660 = vld [vmem:[#allocation10 + $0x10] sm:$0xf]
        %v661 = vld [vmem:[#allocation10 + $0x14] sm:$0xf]
        %v662 = vld [vmem:[#allocation10 + $0x18] sm:$0xf]
        %v663 = vld [vmem:[#allocation10 + $0x1c] sm:$0xf]
        %v664 = vld [vmem:[#allocation10 + $0x20] sm:$0xf]
        %v665 = vld [vmem:[#allocation10 + $0x24] sm:$0xf]
        %v666 = vld [vmem:[#allocation10 + $0x28] sm:$0xf]
        %v667 = vld [vmem:[#allocation10 + $0x2c] sm:$0xf]
        %v668 = vld [vmem:[#allocation10 + $0x30] sm:$0xf]
        %v669 = vld [vmem:[#allocation10 + $0x34] sm:$0xf]
        %v670 = vld [vmem:[#allocation10 + $0x38] sm:$0xf]
        %v671 = vld [vmem:[#allocation10 + $0x3c] sm:$0xf]
        %v672 = vld [vmem:[#allocation12] sm:$0xff]
        %v673 = vld [vmem:[#allocation12 + $0x8] sm:$0xff]
        %v674 = vld [vmem:[#allocation12 + $0x10] sm:$0xff]
        %v675 = vld [vmem:[#allocation12 + $0x18] sm:$0xff]
        %v676 = vld [vmem:[#allocation12 + $0x20] sm:$0xff]
        %v677 = vld [vmem:[#allocation12 + $0x28] sm:$0xff]
        %v678 = vld [vmem:[#allocation12 + $0x30] sm:$0xff]
        %v679 = vld [vmem:[#allocation12 + $0x38] sm:$0xff]
        %v680 = vld [vmem:[#allocation12 + $0x40] sm:$0xff]
        %v681 = vld [vmem:[#allocation12 + $0x48] sm:$0xff]
        %v682 = vld [vmem:[#allocation12 + $0x50] sm:$0xff]
        %v683 = vld [vmem:[#allocation12 + $0x58] sm:$0xff]
        %v684 = vld [vmem:[#allocation12 + $0x60] sm:$0xff]
        %v685 = vld [vmem:[#allocation12 + $0x68] sm:$0xff]
        %v686 = vld [vmem:[#allocation12 + $0x70] sm:$0xff]
        %v687 = vld [vmem:[#allocation12 + $0x78] sm:$0xff]
        %689 = vset.pattern.permute.xlu0 0
        %690 = vperm.xlu0 %689, %v672
        %v691 = vpop.permute.xlu0 %690
        %694 = vset.pattern.permute.xlu0 0
        %695 = vperm.xlu0 %694, %v673
        %v696 = vpop.permute.xlu0 %695
        %699 = vset.pattern.permute.xlu0 0
        %700 = vperm.xlu0 %699, %v674
        %v701 = vpop.permute.xlu0 %700
        %704 = vset.pattern.permute.xlu0 0
        %705 = vperm.xlu0 %704, %v675
        %v706 = vpop.permute.xlu0 %705
        %709 = vset.pattern.permute.xlu0 0
        %710 = vperm.xlu0 %709, %v676
        %v711 = vpop.permute.xlu0 %710
        %714 = vset.pattern.permute.xlu0 0
        %715 = vperm.xlu0 %714, %v677
        %v716 = vpop.permute.xlu0 %715
        %719 = vset.pattern.permute.xlu0 0
        %720 = vperm.xlu0 %719, %v678
        %v721 = vpop.permute.xlu0 %720
        %724 = vset.pattern.permute.xlu0 0
        %725 = vperm.xlu0 %724, %v679
        %v726 = vpop.permute.xlu0 %725
        %729 = vset.pattern.permute.xlu0 0
        %730 = vperm.xlu0 %729, %v680
        %v731 = vpop.permute.xlu0 %730
        %734 = vset.pattern.permute.xlu0 0
        %735 = vperm.xlu0 %734, %v681
        %v736 = vpop.permute.xlu0 %735
        %739 = vset.pattern.permute.xlu0 0
        %740 = vperm.xlu0 %739, %v682
        %v741 = vpop.permute.xlu0 %740
        %744 = vset.pattern.permute.xlu0 0
        %745 = vperm.xlu0 %744, %v683
        %v746 = vpop.permute.xlu0 %745
        %749 = vset.pattern.permute.xlu0 0
        %750 = vperm.xlu0 %749, %v684
        %v751 = vpop.permute.xlu0 %750
        %754 = vset.pattern.permute.xlu0 0
        %755 = vperm.xlu0 %754, %v685
        %v756 = vpop.permute.xlu0 %755
        %759 = vset.pattern.permute.xlu0 0
        %760 = vperm.xlu0 %759, %v686
        %v761 = vpop.permute.xlu0 %760
        %764 = vset.pattern.permute.xlu0 0
        %765 = vperm.xlu0 %764, %v687
        %v766 = vpop.permute.xlu0 %765
        %v784 = vunpack.c.l.b16 %v656
        %v785 = vunpack.c.l.b16 %v657
        %v786 = vunpack.c.l.b16 %v658
        %v787 = vunpack.c.l.b16 %v659
        %v788 = vunpack.c.l.b16 %v660
        %v789 = vunpack.c.l.b16 %v661
        %v790 = vunpack.c.l.b16 %v662
        %v791 = vunpack.c.l.b16 %v663
        %v792 = vunpack.c.l.b16 %v664
        %v793 = vunpack.c.l.b16 %v665
        %v794 = vunpack.c.l.b16 %v666
        %v795 = vunpack.c.l.b16 %v667
        %v796 = vunpack.c.l.b16 %v668
        %v797 = vunpack.c.l.b16 %v669
        %v798 = vunpack.c.l.b16 %v670
        %v799 = vunpack.c.l.b16 %v671
        %v800 = vpack.c.b16 %v785, %v784
        %v801 = vpack.c.b16 %v787, %v786
        %v802 = vpack.c.b16 %v789, %v788
        %v803 = vpack.c.b16 %v791, %v790
        %v804 = vpack.c.b16 %v793, %v792
        %v805 = vpack.c.b16 %v795, %v794
        %v806 = vpack.c.b16 %v797, %v796
        %v807 = vpack.c.b16 %v799, %v798
        %812 = vrot.lane.b32.xlu0 %v652, 1
        %v813 = vpop.permute.xlu0 %812
        %814 = vrot.lane.b32.xlu0 %v653, 1
        %v815 = vpop.permute.xlu0 %814
        %816 = vrot.lane.b32.xlu0 %v654, 1
        %v817 = vpop.permute.xlu0 %816
        %818 = vrot.lane.b32.xlu0 %v655, 1
        %v819 = vpop.permute.xlu0 %818
        %vm820 = vcmask 7168
        %v821 = vsel %vm820, %v813, %v815
        %vm825 = vcmask 392192
        %v827 = vsel %vm825, %v800, 0
        %v830 = vsel %vm825, %v801, 0
        %v833 = vsel %vm825, %v802, 0
        %v836 = vsel %vm825, %v803, 0
        %v839 = vsel %vm825, %v804, 0
        %v842 = vsel %vm825, %v805, 0
        %v845 = vsel %vm825, %v806, 0
        %v848 = vsel %vm825, %v807, 0
        %850 = vmatprep.subr.bf16.mxu0 0
        %851 = vmatpush1.bf16.msra.mxu0 %v821
        %852 = vmatprep.subr.bf16.mxu0 0
        %853 = vmatpush1.bf16.msra.mxu0 %v817
        %854 = vmatprep.subr.bf16.mxu0 0
        %855 = vmatpush1.bf16.msra.mxu0 %v819
        %856 = vmatprep.subr.bf16.mxu0 0
        %857 = vmatpush1.bf16.msra.mxu0 0
        %858 = vmatprep.subr.bf16.mxu0 0
        %859 = vmatpush1.bf16.msra.mxu0 0
        %860 = vmatprep.subr.bf16.mxu0 0
        %861 = vmatpush1.bf16.msra.mxu0 0
        %862 = vmatprep.subr.bf16.mxu0 0
        %863 = vmatpush1.bf16.msra.mxu0 0
        %864 = vmatprep.subr.bf16.mxu0 0
        %865 = vmatpush1.bf16.msra.mxu0 0
        %866 = vmatprep.subr.bf16.mxu0 0
        %867 = vmatpush1.bf16.msra.mxu0 0
        %868 = vmatprep.subr.bf16.mxu0 0
        %869 = vmatpush1.bf16.msra.mxu0 0
        %870 = vmatprep.subr.bf16.mxu0 0
        %871 = vmatpush1.bf16.msra.mxu0 0
        %872 = vmatprep.subr.bf16.mxu0 0
        %873 = vmatpush1.bf16.msra.mxu0 0
        %874 = vmatprep.subr.bf16.mxu0 0
        %875 = vmatpush1.bf16.msra.mxu0 0
        %876 = vmatprep.subr.bf16.mxu0 0
        %877 = vmatpush1.bf16.msra.mxu0 0
        %878 = vmatprep.subr.bf16.mxu0 0
        %879 = vmatpush1.bf16.msra.mxu0 0
        %880 = vmatprep.subr.bf16.mxu0 0
        %881 = vmatpush1.bf16.msra.mxu0 0
        %882 = vmatprep.mubr.bf16.mxu0 0
        %883 = vmatmul.mubr.bf16.gmra.mrb[0].mxu0 %v827
        %v884 = vpop.f32.mrb[0].mxu0
        %v885 = vadd.f32 %v691, %v884
        %v886 = vpop.f32.mrb[0].mxu0
        %v887 = vpop.f32.mrb[0].mxu0
        %v888 = vadd.f32 %v696, %v887
        %v889 = vpop.f32.mrb[0].mxu0
        %890 = vmatprep.mubr.bf16.mxu0 0
        %891 = vmatmul.mubr.bf16.gmra.mrb[0].mxu0 %v830
        %v892 = vpop.f32.mrb[0].mxu0
        %v893 = vadd.f32 %v701, %v892
        %v894 = vpop.f32.mrb[0].mxu0
        %v895 = vpop.f32.mrb[0].mxu0
        %v896 = vadd.f32 %v706, %v895
        %v897 = vpop.f32.mrb[0].mxu0
        %898 = vmatprep.mubr.bf16.mxu0 0
        %899 = vmatmul.mubr.bf16.gmra.mrb[0].mxu0 %v833
        %v900 = vpop.f32.mrb[0].mxu0
        %v901 = vadd.f32 %v711, %v900
        %v902 = vpop.f32.mrb[0].mxu0
        %v903 = vpop.f32.mrb[0].mxu0
        %v904 = vadd.f32 %v716, %v903
        %v905 = vpop.f32.mrb[0].mxu0
        %906 = vmatprep.mubr.bf16.mxu0 0
        %907 = vmatmul.mubr.bf16.gmra.mrb[0].mxu0 %v836
        %v908 = vpop.f32.mrb[0].mxu0
        %v909 = vadd.f32 %v721, %v908
        %v910 = vpop.f32.mrb[0].mxu0
        %v911 = vpop.f32.mrb[0].mxu0
        %v912 = vadd.f32 %v726, %v911
        %v913 = vpop.f32.mrb[0].mxu0
        %914 = vmatprep.mubr.bf16.mxu0 0
        %915 = vmatmul.mubr.bf16.gmra.mrb[0].mxu0 %v839
        %v916 = vpop.f32.mrb[0].mxu0
        %v917 = vadd.f32 %v731, %v916
        %v918 = vpop.f32.mrb[0].mxu0
        %v919 = vpop.f32.mrb[0].mxu0
        %v920 = vadd.f32 %v736, %v919
        %v921 = vpop.f32.mrb[0].mxu0
        %922 = vmatprep.mubr.bf16.mxu0 0
        %923 = vmatmul.mubr.bf16.gmra.mrb[0].mxu0 %v842
        %v924 = vpop.f32.mrb[0].mxu0
        %v925 = vadd.f32 %v741, %v924
        %v926 = vpop.f32.mrb[0].mxu0
        %v927 = vpop.f32.mrb[0].mxu0
        %v928 = vadd.f32 %v746, %v927
        %v929 = vpop.f32.mrb[0].mxu0
        %930 = vmatprep.mubr.bf16.mxu0 0
        %931 = vmatmul.mubr.bf16.gmra.mrb[0].mxu0 %v845
        %v932 = vpop.f32.mrb[0].mxu0
        %v933 = vadd.f32 %v751, %v932
        %v934 = vpop.f32.mrb[0].mxu0
        %v935 = vpop.f32.mrb[0].mxu0
        %v936 = vadd.f32 %v756, %v935
        %v937 = vpop.f32.mrb[0].mxu0
        %938 = vmatprep.mubr.bf16.mxu0 0
        %939 = vmatmul.mubr.bf16.gmra.mrb[0].mxu0 %v848
        %v940 = vpop.f32.mrb[0].mxu0
        %v941 = vadd.f32 %v761, %v940
        %v942 = vpop.f32.mrb[0].mxu0
        %v943 = vpop.f32.mrb[0].mxu0
        %v944 = vadd.f32 %v766, %v943
        %v945 = vpop.f32.mrb[0].mxu0
        %946 = vdwg.mxu0
        %v947 = vtanh.pop %v885
        %v948 = vtanh.pop %v888
        %v949 = vtanh.pop %v893
        %v950 = vtanh.pop %v896
        %v951 = vtanh.pop %v901
        %v952 = vtanh.pop %v904
        %v953 = vtanh.pop %v909
        %v954 = vtanh.pop %v912
        %v955 = vxor.u32 %v917, 2147483648
        %v956 = vxor.u32 %v920, 2147483648
        %v957 = vxor.u32 %v925, 2147483648
        %v958 = vxor.u32 %v928, 2147483648
        %v959 = vxor.u32 %v933, 2147483648
        %v960 = vxor.u32 %v936, 2147483648
        %v961 = vxor.u32 %v941, 2147483648
        %v962 = vxor.u32 %v944, 2147483648
        %v963 = vmul.f32 %v955, 1.442695
        %v964 = vpow.pop %v963
        %v965 = vmul.f32 %v956, 1.442695
        %v966 = vpow.pop %v965
        %v967 = vmul.f32 %v957, 1.442695
        %v968 = vpow.pop %v967
        %v969 = vmul.f32 %v958, 1.442695
        %v970 = vpow.pop %v969
        %v971 = vmul.f32 %v959, 1.442695
        %v972 = vpow.pop %v971
        %v973 = vmul.f32 %v960, 1.442695
        %v974 = vpow.pop %v973
        %v975 = vmul.f32 %v961, 1.442695
        %v976 = vpow.pop %v975
        %v977 = vmul.f32 %v962, 1.442695
        %v978 = vpow.pop %v977
        %v979 = vadd.f32 %v964, 1.0
        %v980 = vadd.f32 %v966, 1.0
        %v981 = vadd.f32 %v968, 1.0
        %v982 = vadd.f32 %v970, 1.0
        %v983 = vadd.f32 %v972, 1.0
        %v984 = vadd.f32 %v974, 1.0
        %v985 = vadd.f32 %v976, 1.0
        %v986 = vadd.f32 %v978, 1.0
        %v987 = vrcp.pop %v979
        %v988 = vmul.f32 1.0, %v987
        %v989 = vrcp.pop %v980
        %v990 = vmul.f32 1.0, %v989
        %v991 = vrcp.pop %v981
        %v992 = vmul.f32 1.0, %v991
        %v993 = vrcp.pop %v982
        %v994 = vmul.f32 1.0, %v993
        %v995 = vrcp.pop %v983
        %v996 = vmul.f32 1.0, %v995
        %v997 = vrcp.pop %v984
        %v998 = vmul.f32 1.0, %v997
        %v999 = vrcp.pop %v985
        %v1000 = vmul.f32 1.0, %v999
        %v1001 = vrcp.pop %v986
        %v1002 = vmul.f32 1.0, %v1001
        %v1003 = vmul.f32 %v947, %v988
        %v1004 = vmul.f32 %v948, %v990
        %v1005 = vmul.f32 %v949, %v992
        %v1006 = vmul.f32 %v950, %v994
        %v1007 = vmul.f32 %v951, %v996
        %v1008 = vmul.f32 %v952, %v998
        %v1009 = vmul.f32 %v953, %v1000
        %v1010 = vmul.f32 %v954, %v1002
        %v1011 = vld [vmem:[#allocation13] sm:$0xf]
        %v1012 = vld [vmem:[#allocation13 + $0x4] sm:$0xf]
        %v1013 = vld [vmem:[#allocation13 + $0x8] sm:$0xf]
        %v1014 = vld [vmem:[#allocation13 + $0xc] sm:$0xf]
        %v1015 = vld [vmem:[#allocation13 + $0x10] sm:$0xf]
        %v1016 = vld [vmem:[#allocation13 + $0x14] sm:$0xf]
        %v1017 = vld [vmem:[#allocation13 + $0x18] sm:$0xf]
        %v1018 = vld [vmem:[#allocation13 + $0x1c] sm:$0xf]
        %v1019 = vld [vmem:[#allocation13 + $0x20] sm:$0xf]
        %v1020 = vld [vmem:[#allocation13 + $0x24] sm:$0xf]
        %v1021 = vpack.c.bf16 %v1004, %v1003
        %v1022 = vpack.c.bf16 %v1006, %v1005
        %v1023 = vpack.c.bf16 %v1008, %v1007
        %v1024 = vpack.c.bf16 %v1010, %v1009
        %v1025 = vld [vmem:[#allocation15] sm:$0xff]
        %v1026 = vld [vmem:[#allocation15 + $0x8] sm:$0xff]
        %v1027 = vld [vmem:[#allocation15 + $0x10] sm:$0xff]
        %v1028 = vld [vmem:[#allocation15 + $0x18] sm:$0xff]
        %v1029 = vld [vmem:[#allocation15 + $0x20] sm:$0xff]
        %v1030 = vld [vmem:[#allocation15 + $0x28] sm:$0xff]
        %v1031 = vld [vmem:[#allocation15 + $0x30] sm:$0xff]
        %v1032 = vld [vmem:[#allocation15 + $0x38] sm:$0xff]
        %v1033 = vld [vmem:[#allocation15 + $0x40] sm:$0xff]
        %v1034 = vld [vmem:[#allocation15 + $0x48] sm:$0xff]
        %1036 = vset.pattern.permute.xlu0 0
        %1037 = vperm.xlu0 %1036, %v1025
        %v1038 = vpop.permute.xlu0 %1037
        %1041 = vset.pattern.permute.xlu0 0
        %1042 = vperm.xlu0 %1041, %v1026
        %v1043 = vpop.permute.xlu0 %1042
        %1046 = vset.pattern.permute.xlu0 0
        %1047 = vperm.xlu0 %1046, %v1027
        %v1048 = vpop.permute.xlu0 %1047
        %1051 = vset.pattern.permute.xlu0 0
        %1052 = vperm.xlu0 %1051, %v1028
        %v1053 = vpop.permute.xlu0 %1052
        %1056 = vset.pattern.permute.xlu0 0
        %1057 = vperm.xlu0 %1056, %v1029
        %v1058 = vpop.permute.xlu0 %1057
        %1061 = vset.pattern.permute.xlu0 0
        %1062 = vperm.xlu0 %1061, %v1030
        %v1063 = vpop.permute.xlu0 %1062
        %1066 = vset.pattern.permute.xlu0 0
        %1067 = vperm.xlu0 %1066, %v1031
        %v1068 = vpop.permute.xlu0 %1067
        %1071 = vset.pattern.permute.xlu0 0
        %1072 = vperm.xlu0 %1071, %v1032
        %v1073 = vpop.permute.xlu0 %1072
        %1076 = vset.pattern.permute.xlu0 0
        %1077 = vperm.xlu0 %1076, %v1033
        %v1078 = vpop.permute.xlu0 %1077
        %1081 = vset.pattern.permute.xlu0 0
        %1082 = vperm.xlu0 %1081, %v1034
        %v1083 = vpop.permute.xlu0 %1082
        %v1095 = vunpack.c.l.b16 %v1011
        %v1096 = vunpack.c.l.b16 %v1012
        %v1097 = vunpack.c.l.b16 %v1013
        %v1098 = vunpack.c.l.b16 %v1014
        %v1099 = vunpack.c.l.b16 %v1015
        %v1100 = vunpack.c.l.b16 %v1016
        %v1101 = vunpack.c.l.b16 %v1017
        %v1102 = vunpack.c.l.b16 %v1018
        %v1103 = vunpack.c.l.b16 %v1019
        %v1104 = vunpack.c.l.b16 %v1020
        %v1105 = vpack.c.b16 %v1096, %v1095
        %v1106 = vpack.c.b16 %v1098, %v1097
        %v1107 = vpack.c.b16 %v1100, %v1099
        %v1108 = vpack.c.b16 %v1102, %v1101
        %v1109 = vpack.c.b16 %v1104, %v1103
        %vm1110 = vcmask 523264
        %v1112 = vsel %vm1110, %v1105, 0
        %v1115 = vsel %vm1110, %v1106, 0
        %v1118 = vsel %vm1110, %v1107, 0
        %v1121 = vsel %vm1110, %v1108, 0
        %v1124 = vsel %vm1110, %v1109, 0
        %1126 = vmatprep.subr.bf16.mxu0 0
        %1127 = vmatpush1.bf16.msra.mxu0 %v1021
        %1128 = vmatprep.subr.bf16.mxu0 0
        %1129 = vmatpush1.bf16.msra.mxu0 %v1022
        %1130 = vmatprep.subr.bf16.mxu0 0
        %1131 = vmatpush1.bf16.msra.mxu0 %v1023
        %1132 = vmatprep.subr.bf16.mxu0 0
        %1133 = vmatpush1.bf16.msra.mxu0 %v1024
        %1134 = vmatprep.subr.bf16.mxu0 0
        %1135 = vmatpush1.bf16.msra.mxu0 0
        %1136 = vmatprep.subr.bf16.mxu0 0
        %1137 = vmatpush1.bf16.msra.mxu0 0
        %1138 = vmatprep.subr.bf16.mxu0 0
        %1139 = vmatpush1.bf16.msra.mxu0 0
        %1140 = vmatprep.subr.bf16.mxu0 0
        %1141 = vmatpush1.bf16.msra.mxu0 0
        %1142 = vmatprep.subr.bf16.mxu0 0
        %1143 = vmatpush1.bf16.msra.mxu0 0
        %1144 = vmatprep.subr.bf16.mxu0 0
        %1145 = vmatpush1.bf16.msra.mxu0 0
        %1146 = vmatprep.subr.bf16.mxu0 0
        %1147 = vmatpush1.bf16.msra.mxu0 0
        %1148 = vmatprep.subr.bf16.mxu0 0
        %1149 = vmatpush1.bf16.msra.mxu0 0
        %1150 = vmatprep.subr.bf16.mxu0 0
        %1151 = vmatpush1.bf16.msra.mxu0 0
        %1152 = vmatprep.subr.bf16.mxu0 0
        %1153 = vmatpush1.bf16.msra.mxu0 0
        %1154 = vmatprep.subr.bf16.mxu0 0
        %1155 = vmatpush1.bf16.msra.mxu0 0
        %1156 = vmatprep.subr.bf16.mxu0 0
        %1157 = vmatpush1.bf16.msra.mxu0 0
        %1158 = vmatprep.mubr.bf16.mxu0 0
        %1159 = vmatmul.mubr.bf16.gmra.mrb[0].mxu0 %v1112
        %v1160 = vpop.f32.mrb[0].mxu0
        %v1161 = vadd.f32 %v1038, %v1160
        %v1162 = vpop.f32.mrb[0].mxu0
        %v1163 = vpop.f32.mrb[0].mxu0
        %v1164 = vadd.f32 %v1043, %v1163
        %v1165 = vpop.f32.mrb[0].mxu0
        %1166 = vmatprep.mubr.bf16.mxu0 0
        %1167 = vmatmul.mubr.bf16.gmra.mrb[0].mxu0 %v1115
        %v1168 = vpop.f32.mrb[0].mxu0
        %v1169 = vadd.f32 %v1048, %v1168
        %v1170 = vpop.f32.mrb[0].mxu0
        %v1171 = vpop.f32.mrb[0].mxu0
        %v1172 = vadd.f32 %v1053, %v1171
        %v1173 = vpop.f32.mrb[0].mxu0
        %1174 = vmatprep.mubr.bf16.mxu0 0
        %1175 = vmatmul.mubr.bf16.gmra.mrb[0].mxu0 %v1118
        %v1176 = vpop.f32.mrb[0].mxu0
        %v1177 = vadd.f32 %v1058, %v1176
        %v1178 = vpop.f32.mrb[0].mxu0
        %v1179 = vpop.f32.mrb[0].mxu0
        %v1180 = vadd.f32 %v1063, %v1179
        %v1181 = vpop.f32.mrb[0].mxu0
        %1182 = vmatprep.mubr.bf16.mxu0 0
        %1183 = vmatmul.mubr.bf16.gmra.mrb[0].mxu0 %v1121
        %v1184 = vpop.f32.mrb[0].mxu0
        %v1185 = vadd.f32 %v1068, %v1184
        %v1186 = vpop.f32.mrb[0].mxu0
        %v1187 = vpop.f32.mrb[0].mxu0
        %v1188 = vadd.f32 %v1073, %v1187
        %v1189 = vpop.f32.mrb[0].mxu0
        %1190 = vmatprep.mubr.bf16.mxu0 0
        %1191 = vmatmul.mubr.bf16.gmra.mrb[0].mxu0 %v1124
        %v1192 = vpop.f32.mrb[0].mxu0
        %v1193 = vadd.f32 %v1078, %v1192
        %v1194 = vpop.f32.mrb[0].mxu0
        %v1195 = vpop.f32.mrb[0].mxu0
        %v1196 = vadd.f32 %v1083, %v1195
        %v1197 = vpop.f32.mrb[0].mxu0
        %1198 = vdwg.mxu0
        %v1199 = vld [vmem:[#allocation3] sm:$0xff]
        %v1200 = vld [vmem:[#allocation3 + $0x8] sm:$0xff]
        %v1201 = vld [vmem:[#allocation3 + $0x10] sm:$0xff]
        %v1202 = vld [vmem:[#allocation3 + $0x18] sm:$0xff]
        %v1203 = vld [vmem:[#allocation3 + $0x20] sm:$0xff]
        %v1204 = vld [vmem:[#allocation3 + $0x28] sm:$0xff]
        %v1205 = vld [vmem:[#allocation3 + $0x30] sm:$0xff]
        %v1206 = vld [vmem:[#allocation3 + $0x38] sm:$0xff]
        %v1207 = vadd.f32 %v1199, %v1161
        %v1208 = vadd.f32 %v1200, %v1164
        %v1209 = vadd.f32 %v1201, %v1169
        %v1210 = vadd.f32 %v1202, %v1172
        %v1211 = vadd.f32 %v1203, %v1177
        %v1212 = vadd.f32 %v1204, %v1180
        %v1213 = vadd.f32 %v1205, %v1185
        %v1214 = vadd.f32 %v1206, %v1188
        %1215 = vst.msk [vmem:[#allocation3] sm:$0xff] %vm623, %v1207
        %1216 = vst.msk [vmem:[#allocation3 + $0x8] sm:$0xff] %vm623, %v1208
        %1217 = vst.msk [vmem:[#allocation3 + $0x10] sm:$0xff] %vm623, %v1209
        %1218 = vst.msk [vmem:[#allocation3 + $0x18] sm:$0xff] %vm623, %v1210
        %1219 = vst.msk [vmem:[#allocation3 + $0x20] sm:$0xff] %vm623, %v1211
        %1220 = vst.msk [vmem:[#allocation3 + $0x28] sm:$0xff] %vm623, %v1212
        %1221 = vst.msk [vmem:[#allocation3 + $0x30] sm:$0xff] %vm623, %v1213
        %1222 = vst.msk [vmem:[#allocation3 + $0x38] sm:$0xff] %vm623, %v1214
        %v1223 = vld [vmem:[#allocation2 + $0x8] sm:$0xff]
        %v1224 = vld [vmem:[#allocation2 + $0x18] sm:$0xff]
        %v1225 = vadd.f32 %v1193, %v1223
        %v1226 = vadd.f32 %v1196, %v1224
        %v1227 = vmul.f32 %v1225, 0.70710677
        %v1228 = vmul.f32 %v1226, 0.70710677
        %1229 = vst.msk [vmem:[#allocation2 + $0x8] sm:$0xff] %vm623, %v1227
        %1230 = vst.msk [vmem:[#allocation2 + $0x18] sm:$0xff] %vm623, %v1228
        %v1231 = vld [vmem:[#allocation2] sm:$0xff]
        %v1232 = vld [vmem:[#allocation2 + $0x8] sm:$0xff]
        %v1233 = vld [vmem:[#allocation2 + $0x10] sm:$0xff]
        %v1234 = vld [vmem:[#allocation2 + $0x18] sm:$0xff]
        %1237 = vrot.lane.b32.xlu0 %v1232, 126
        %v1238 = vpop.permute.xlu0 %1237
        %1239 = vrot.lane.b32.xlu0 %v1234, 126
        %v1240 = vpop.permute.xlu0 %1239
        %1243 = vrot.lane.b32.xlu0 %v1232, 124
        %v1244 = vpop.permute.xlu0 %1243
        %1245 = vrot.lane.b32.xlu0 %v1234, 124
        %v1246 = vpop.permute.xlu0 %1245
        %v1249 = vpack.c.bf16 %v1233, %v1231
        %v1250 = vpack.c.bf16 %v1234, %v1232
        %v1251 = vpack.c.bf16 %v1240, %v1238
        %v1252 = vpack.c.bf16 %v1246, %v1244
        %s1253 = scalar_lea.vmem [#allocation10], 64
        %v1254 = vld [vmem:[%s1253] sm:$0xf]
        %v1255 = vld [vmem:[%s1253 + $0x4] sm:$0xf]
        %v1256 = vld [vmem:[%s1253 + $0x8] sm:$0xf]
        %v1257 = vld [vmem:[%s1253 + $0xc] sm:$0xf]
        %v1258 = vld [vmem:[%s1253 + $0x10] sm:$0xf]
        %v1259 = vld [vmem:[%s1253 + $0x14] sm:$0xf]
        %v1260 = vld [vmem:[%s1253 + $0x18] sm:$0xf]
        %v1261 = vld [vmem:[%s1253 + $0x1c] sm:$0xf]
        %v1262 = vld [vmem:[%s1253 + $0x20] sm:$0xf]
        %v1263 = vld [vmem:[%s1253 + $0x24] sm:$0xf]
        %v1264 = vld [vmem:[%s1253 + $0x28] sm:$0xf]
        %v1265 = vld [vmem:[%s1253 + $0x2c] sm:$0xf]
        %v1266 = vld [vmem:[%s1253 + $0x30] sm:$0xf]
        %v1267 = vld [vmem:[%s1253 + $0x34] sm:$0xf]
        %v1268 = vld [vmem:[%s1253 + $0x38] sm:$0xf]
        %v1269 = vld [vmem:[%s1253 + $0x3c] sm:$0xf]
        %s1270 = scalar_lea.vmem [#allocation12], 128
        %v1271 = vld [vmem:[%s1270] sm:$0xff]
        %v1272 = vld [vmem:[%s1270 + $0x8] sm:$0xff]
        %v1273 = vld [vmem:[%s1270 + $0x10] sm:$0xff]
        %v1274 = vld [vmem:[%s1270 + $0x18] sm:$0xff]
        %v1275 = vld [vmem:[%s1270 + $0x20] sm:$0xff]
        %v1276 = vld [vmem:[%s1270 + $0x28] sm:$0xff]
        %v1277 = vld [vmem:[%s1270 + $0x30] sm:$0xff]
        %v1278 = vld [vmem:[%s1270 + $0x38] sm:$0xff]
        %v1279 = vld [vmem:[%s1270 + $0x40] sm:$0xff]
        %v1280 = vld [vmem:[%s1270 + $0x48] sm:$0xff]
        %v1281 = vld [vmem:[%s1270 + $0x50] sm:$0xff]
        %v1282 = vld [vmem:[%s1270 + $0x58] sm:$0xff]
        %v1283 = vld [vmem:[%s1270 + $0x60] sm:$0xff]
        %v1284 = vld [vmem:[%s1270 + $0x68] sm:$0xff]
        %v1285 = vld [vmem:[%s1270 + $0x70] sm:$0xff]
        %v1286 = vld [vmem:[%s1270 + $0x78] sm:$0xff]
        %1288 = vset.pattern.permute.xlu0 0
        %1289 = vperm.xlu0 %1288, %v1271
        %v1290 = vpop.permute.xlu0 %1289
        %1293 = vset.pattern.permute.xlu0 0
        %1294 = vperm.xlu0 %1293, %v1272
        %v1295 = vpop.permute.xlu0 %1294
        %1298 = vset.pattern.permute.xlu0 0
        %1299 = vperm.xlu0 %1298, %v1273
        %v1300 = vpop.permute.xlu0 %1299
        %1303 = vset.pattern.permute.xlu0 0
        %1304 = vperm.xlu0 %1303, %v1274
        %v1305 = vpop.permute.xlu0 %1304
        %1308 = vset.pattern.permute.xlu0 0
        %1309 = vperm.xlu0 %1308, %v1275
        %v1310 = vpop.permute.xlu0 %1309
        %1313 = vset.pattern.permute.xlu0 0
        %1314 = vperm.xlu0 %1313, %v1276
        %v1315 = vpop.permute.xlu0 %1314
        %1318 = vset.pattern.permute.xlu0 0
        %1319 = vperm.xlu0 %1318, %v1277
        %v1320 = vpop.permute.xlu0 %1319
        %1323 = vset.pattern.permute.xlu0 0
        %1324 = vperm.xlu0 %1323, %v1278
        %v1325 = vpop.permute.xlu0 %1324
        %1328 = vset.pattern.permute.xlu0 0
        %1329 = vperm.xlu0 %1328, %v1279
        %v1330 = vpop.permute.xlu0 %1329
        %1333 = vset.pattern.permute.xlu0 0
        %1334 = vperm.xlu0 %1333, %v1280
        %v1335 = vpop.permute.xlu0 %1334
        %1338 = vset.pattern.permute.xlu0 0
        %1339 = vperm.xlu0 %1338, %v1281
        %v1340 = vpop.permute.xlu0 %1339
        %1343 = vset.pattern.permute.xlu0 0
        %1344 = vperm.xlu0 %1343, %v1282
        %v1345 = vpop.permute.xlu0 %1344
        %1348 = vset.pattern.permute.xlu0 0
        %1349 = vperm.xlu0 %1348, %v1283
        %v1350 = vpop.permute.xlu0 %1349
        %1353 = vset.pattern.permute.xlu0 0
        %1354 = vperm.xlu0 %1353, %v1284
        %v1355 = vpop.permute.xlu0 %1354
        %1358 = vset.pattern.permute.xlu0 0
        %1359 = vperm.xlu0 %1358, %v1285
        %v1360 = vpop.permute.xlu0 %1359
        %1363 = vset.pattern.permute.xlu0 0
        %1364 = vperm.xlu0 %1363, %v1286
        %v1365 = vpop.permute.xlu0 %1364
        %v1383 = vunpack.c.l.b16 %v1254
        %v1384 = vunpack.c.l.b16 %v1255
        %v1385 = vunpack.c.l.b16 %v1256
        %v1386 = vunpack.c.l.b16 %v1257
        %v1387 = vunpack.c.l.b16 %v1258
        %v1388 = vunpack.c.l.b16 %v1259
        %v1389 = vunpack.c.l.b16 %v1260
        %v1390 = vunpack.c.l.b16 %v1261
        %v1391 = vunpack.c.l.b16 %v1262
        %v1392 = vunpack.c.l.b16 %v1263
        %v1393 = vunpack.c.l.b16 %v1264
        %v1394 = vunpack.c.l.b16 %v1265
        %v1395 = vunpack.c.l.b16 %v1266
        %v1396 = vunpack.c.l.b16 %v1267
        %v1397 = vunpack.c.l.b16 %v1268
        %v1398 = vunpack.c.l.b16 %v1269
        %v1399 = vpack.c.b16 %v1384, %v1383
        %v1400 = vpack.c.b16 %v1386, %v1385
        %v1401 = vpack.c.b16 %v1388, %v1387
        %v1402 = vpack.c.b16 %v1390, %v1389
        %v1403 = vpack.c.b16 %v1392, %v1391
        %v1404 = vpack.c.b16 %v1394, %v1393
        %v1405 = vpack.c.b16 %v1396, %v1395
        %v1406 = vpack.c.b16 %v1398, %v1397
        %1411 = vrot.lane.b32.xlu0 %v1249, 2
        %v1412 = vpop.permute.xlu0 %1411
        %1413 = vrot.lane.b32.xlu0 %v1250, 2
        %v1414 = vpop.permute.xlu0 %1413
        %1415 = vrot.lane.b32.xlu0 %v1251, 2
        %v1416 = vpop.permute.xlu0 %1415
        %1417 = vrot.lane.b32.xlu0 %v1252, 2
        %v1418 = vpop.permute.xlu0 %1417
        %vm1419 = vcmask 15360
        %v1420 = vsel %vm1419, %v1412, %v1414
        %v1425 = vsel %vm825, %v1399, 0
        %v1428 = vsel %vm825, %v1400, 0
        %v1431 = vsel %vm825, %v1401, 0
        %v1434 = vsel %vm825, %v1402, 0
        %v1437 = vsel %vm825, %v1403, 0
        %v1440 = vsel %vm825, %v1404, 0
        %v1443 = vsel %vm825, %v1405, 0
        %v1446 = vsel %vm825, %v1406, 0
        %1448 = vmatprep.subr.bf16.mxu0 0
        %1449 = vmatpush1.bf16.msra.mxu0 %v1420
        %1450 = vmatprep.subr.bf16.mxu0 0
        %1451 = vmatpush1.bf16.msra.mxu0 %v1416
        %1452 = vmatprep.subr.bf16.mxu0 0
        %1453 = vmatpush1.bf16.msra.mxu0 %v1418
        %1454 = vmatprep.subr.bf16.mxu0 0
        %1455 = vmatpush1.bf16.msra.mxu0 0
        %1456 = vmatprep.subr.bf16.mxu0 0
        %1457 = vmatpush1.bf16.msra.mxu0 0
        %1458 = vmatprep.subr.bf16.mxu0 0
        %1459 = vmatpush1.bf16.msra.mxu0 0
        %1460 = vmatprep.subr.bf16.mxu0 0
        %1461 = vmatpush1.bf16.msra.mxu0 0
        %1462 = vmatprep.subr.bf16.mxu0 0
        %1463 = vmatpush1.bf16.msra.mxu0 0
        %1464 = vmatprep.subr.bf16.mxu0 0
        %1465 = vmatpush1.bf16.msra.mxu0 0
        %1466 = vmatprep.subr.bf16.mxu0 0
        %1467 = vmatpush1.bf16.msra.mxu0 0
        %1468 = vmatprep.subr.bf16.mxu0 0
        %1469 = vmatpush1.bf16.msra.mxu0 0
        %1470 = vmatprep.subr.bf16.mxu0 0
        %1471 = vmatpush1.bf16.msra.mxu0 0
        %1472 = vmatprep.subr.bf16.mxu0 0
        %1473 = vmatpush1.bf16.msra.mxu0 0
        %1474 = vmatprep.subr.bf16.mxu0 0
        %1475 = vmatpush1.bf16.msra.mxu0 0
        %1476 = vmatprep.subr.bf16.mxu0 0
        %1477 = vmatpush1.bf16.msra.mxu0 0
        %1478 = vmatprep.subr.bf16.mxu0 0
        %1479 = vmatpush1.bf16.msra.mxu0 0
        %1480 = vmatprep.mubr.bf16.mxu0 0
        %1481 = vmatmul.mubr.bf16.gmra.mrb[0].mxu0 %v1425
        %v1482 = vpop.f32.mrb[0].mxu0
        %v1483 = vadd.f32 %v1290, %v1482
        %v1484 = vpop.f32.mrb[0].mxu0
        %v1485 = vpop.f32.mrb[0].mxu0
        %v1486 = vadd.f32 %v1295, %v1485
        %v1487 = vpop.f32.mrb[0].mxu0
        %1488 = vmatprep.mubr.bf16.mxu0 0
        %1489 = vmatmul.mubr.bf16.gmra.mrb[0].mxu0 %v1428
        %v1490 = vpop.f32.mrb[0].mxu0
        %v1491 = vadd.f32 %v1300, %v1490
        %v1492 = vpop.f32.mrb[0].mxu0
        %v1493 = vpop.f32.mrb[0].mxu0
        %v1494 = vadd.f32 %v1305, %v1493
        %v1495 = vpop.f32.mrb[0].mxu0
        %1496 = vmatprep.mubr.bf16.mxu0 0
        %1497 = vmatmul.mubr.bf16.gmra.mrb[0].mxu0 %v1431
        %v1498 = vpop.f32.mrb[0].mxu0
        %v1499 = vadd.f32 %v1310, %v1498
        %v1500 = vpop.f32.mrb[0].mxu0
        %v1501 = vpop.f32.mrb[0].mxu0
        %v1502 = vadd.f32 %v1315, %v1501
        %v1503 = vpop.f32.mrb[0].mxu0
        %1504 = vmatprep.mubr.bf16.mxu0 0
        %1505 = vmatmul.mubr.bf16.gmra.mrb[0].mxu0 %v1434
        %v1506 = vpop.f32.mrb[0].mxu0
        %v1507 = vadd.f32 %v1320, %v1506
        %v1508 = vpop.f32.mrb[0].mxu0
        %v1509 = vpop.f32.mrb[0].mxu0
        %v1510 = vadd.f32 %v1325, %v1509
        %v1511 = vpop.f32.mrb[0].mxu0
        %1512 = vmatprep.mubr.bf16.mxu0 0
        %1513 = vmatmul.mubr.bf16.gmra.mrb[0].mxu0 %v1437
        %v1514 = vpop.f32.mrb[0].mxu0
        %v1515 = vadd.f32 %v1330, %v1514
        %v1516 = vpop.f32.mrb[0].mxu0
        %v1517 = vpop.f32.mrb[0].mxu0
        %v1518 = vadd.f32 %v1335, %v1517
        %v1519 = vpop.f32.mrb[0].mxu0
        %1520 = vmatprep.mubr.bf16.mxu0 0
        %1521 = vmatmul.mubr.bf16.gmra.mrb[0].mxu0 %v1440
        %v1522 = vpop.f32.mrb[0].mxu0
        %v1523 = vadd.f32 %v1340, %v1522
        %v1524 = vpop.f32.mrb[0].mxu0
        %v1525 = vpop.f32.mrb[0].mxu0
        %v1526 = vadd.f32 %v1345, %v1525
        %v1527 = vpop.f32.mrb[0].mxu0
        %1528 = vmatprep.mubr.bf16.mxu0 0
        %1529 = vmatmul.mubr.bf16.gmra.mrb[0].mxu0 %v1443
        %v1530 = vpop.f32.mrb[0].mxu0
        %v1531 = vadd.f32 %v1350, %v1530
        %v1532 = vpop.f32.mrb[0].mxu0
        %v1533 = vpop.f32.mrb[0].mxu0
        %v1534 = vadd.f32 %v1355, %v1533
        %v1535 = vpop.f32.mrb[0].mxu0
        %1536 = vmatprep.mubr.bf16.mxu0 0
        %1537 = vmatmul.mubr.bf16.gmra.mrb[0].mxu0 %v1446
        %v1538 = vpop.f32.mrb[0].mxu0
        %v1539 = vadd.f32 %v1360, %v1538
        %v1540 = vpop.f32.mrb[0].mxu0
        %v1541 = vpop.f32.mrb[0].mxu0
        %v1542 = vadd.f32 %v1365, %v1541
        %v1543 = vpop.f32.mrb[0].mxu0
        %1544 = vdwg.mxu0
        %v1545 = vtanh.pop %v1483
        %v1546 = vtanh.pop %v1486
        %v1547 = vtanh.pop %v1491
        %v1548 = vtanh.pop %v1494
        %v1549 = vtanh.pop %v1499
        %v1550 = vtanh.pop %v1502
        %v1551 = vtanh.pop %v1507
        %v1552 = vtanh.pop %v1510
        %v1553 = vxor.u32 %v1515, 2147483648
        %v1554 = vxor.u32 %v1518, 2147483648
        %v1555 = vxor.u32 %v1523, 2147483648
        %v1556 = vxor.u32 %v1526, 2147483648
        %v1557 = vxor.u32 %v1531, 2147483648
        %v1558 = vxor.u32 %v1534, 2147483648
        %v1559 = vxor.u32 %v1539, 2147483648
        %v1560 = vxor.u32 %v1542, 2147483648
        %v1561 = vmul.f32 %v1553, 1.442695
        %v1562 = vpow.pop %v1561
        %v1563 = vmul.f32 %v1554, 1.442695
        %v1564 = vpow.pop %v1563
        %v1565 = vmul.f32 %v1555, 1.442695
        %v1566 = vpow.pop %v1565
        %v1567 = vmul.f32 %v1556, 1.442695
        %v1568 = vpow.pop %v1567
        %v1569 = vmul.f32 %v1557, 1.442695
        %v1570 = vpow.pop %v1569
        %v1571 = vmul.f32 %v1558, 1.442695
        %v1572 = vpow.pop %v1571
        %v1573 = vmul.f32 %v1559, 1.442695
        %v1574 = vpow.pop %v1573
        %v1575 = vmul.f32 %v1560, 1.442695
        %v1576 = vpow.pop %v1575
        %v1577 = vadd.f32 %v1562, 1.0
        %v1578 = vadd.f32 %v1564, 1.0
        %v1579 = vadd.f32 %v1566, 1.0
        %v1580 = vadd.f32 %v1568, 1.0
        %v1581 = vadd.f32 %v1570, 1.0
        %v1582 = vadd.f32 %v1572, 1.0
        %v1583 = vadd.f32 %v1574, 1.0
        %v1584 = vadd.f32 %v1576, 1.0
        %v1585 = vrcp.pop %v1577
        %v1586 = vmul.f32 1.0, %v1585
        %v1587 = vrcp.pop %v1578
        %v1588 = vmul.f32 1.0, %v1587
        %v1589 = vrcp.pop %v1579
        %v1590 = vmul.f32 1.0, %v1589
        %v1591 = vrcp.pop %v1580
        %v1592 = vmul.f32 1.0, %v1591
        %v1593 = vrcp.pop %v1581
        %v1594 = vmul.f32 1.0, %v1593
        %v1595 = vrcp.pop %v1582
        %v1596 = vmul.f32 1.0, %v1595
        %v1597 = vrcp.pop %v1583
        %v1598 = vmul.f32 1.0, %v1597
        %v1599 = vrcp.pop %v1584
        %v1600 = vmul.f32 1.0, %v1599
        %v1601 = vmul.f32 %v1545, %v1586
        %v1602 = vmul.f32 %v1546, %v1588
        %v1603 = vmul.f32 %v1547, %v1590
        %v1604 = vmul.f32 %v1548, %v1592
        %v1605 = vmul.f32 %v1549, %v1594
        %v1606 = vmul.f32 %v1550, %v1596
        %v1607 = vmul.f32 %v1551, %v1598
        %v1608 = vmul.f32 %v1552, %v1600
        %s1609 = scalar_lea.vmem [#allocation13], 40
        %v1610 = vld [vmem:[%s1609] sm:$0xf]
        %v1611 = vld [vmem:[%s1609 + $0x4] sm:$0xf]
        %v1612 = vld [vmem:[%s1609 + $0x8] sm:$0xf]
        %v1613 = vld [vmem:[%s1609 + $0xc] sm:$0xf]
        %v1614 = vld [vmem:[%s1609 + $0x10] sm:$0xf]
        %v1615 = vld [vmem:[%s1609 + $0x14] sm:$0xf]
        %v1616 = vld [vmem:[%s1609 + $0x18] sm:$0xf]
        %v1617 = vld [vmem:[%s1609 + $0x1c] sm:$0xf]
        %v1618 = vld [vmem:[%s1609 + $0x20] sm:$0xf]
        %v1619 = vld [vmem:[%s1609 + $0x24] sm:$0xf]
        %v1620 = vpack.c.bf16 %v1602, %v1601
        %v1621 = vpack.c.bf16 %v1604, %v1603
        %v1622 = vpack.c.bf16 %v1606, %v1605
        %v1623 = vpack.c.bf16 %v1608, %v1607
        %s1624 = scalar_lea.vmem [#allocation15], 80
        %v1625 = vld [vmem:[%s1624] sm:$0xff]
        %v1626 = vld [vmem:[%s1624 + $0x8] sm:$0xff]
        %v1627 = vld [vmem:[%s1624 + $0x10] sm:$0xff]
        %v1628 = vld [vmem:[%s1624 + $0x18] sm:$0xff]
        %v1629 = vld [vmem:[%s1624 + $0x20] sm:$0xff]
        %v1630 = vld [vmem:[%s1624 + $0x28] sm:$0xff]
        %v1631 = vld [vmem:[%s1624 + $0x30] sm:$0xff]
        %v1632 = vld [vmem:[%s1624 + $0x38] sm:$0xff]
        %v1633 = vld [vmem:[%s1624 + $0x40] sm:$0xff]
        %v1634 = vld [vmem:[%s1624 + $0x48] sm:$0xff]
        %1636 = vset.pattern.permute.xlu0 0
        %1637 = vperm.xlu0 %1636, %v1625
        %v1638 = vpop.permute.xlu0 %1637
        %1641 = vset.pattern.permute.xlu0 0
        %1642 = vperm.xlu0 %1641, %v1626
        %v1643 = vpop.permute.xlu0 %1642
        %1646 = vset.pattern.permute.xlu0 0
        %1647 = vperm.xlu0 %1646, %v1627
        %v1648 = vpop.permute.xlu0 %1647
        %1651 = vset.pattern.permute.xlu0 0
        %1652 = vperm.xlu0 %1651, %v1628
        %v1653 = vpop.permute.xlu0 %1652
        %1656 = vset.pattern.permute.xlu0 0
        %1657 = vperm.xlu0 %1656, %v1629
        %v1658 = vpop.permute.xlu0 %1657
        %1661 = vset.pattern.permute.xlu0 0
        %1662 = vperm.xlu0 %1661, %v1630
        %v1663 = vpop.permute.xlu0 %1662
        %1666 = vset.pattern.permute.xlu0 0
        %1667 = vperm.xlu0 %1666, %v1631
        %v1668 = vpop.permute.xlu0 %1667
        %1671 = vset.pattern.permute.xlu0 0
        %1672 = vperm.xlu0 %1671, %v1632
        %v1673 = vpop.permute.xlu0 %1672
        %1676 = vset.pattern.permute.xlu0 0
        %1677 = vperm.xlu0 %1676, %v1633
        %v1678 = vpop.permute.xlu0 %1677
        %1681 = vset.pattern.permute.xlu0 0
        %1682 = vperm.xlu0 %1681, %v1634
        %v1683 = vpop.permute.xlu0 %1682
        %v1695 = vunpack.c.l.b16 %v1610
        %v1696 = vunpack.c.l.b16 %v1611
        %v1697 = vunpack.c.l.b16 %v1612
        %v1698 = vunpack.c.l.b16 %v1613
        %v1699 = vunpack.c.l.b16 %v1614
        %v1700 = vunpack.c.l.b16 %v1615
        %v1701 = vunpack.c.l.b16 %v1616
        %v1702 = vunpack.c.l.b16 %v1617
        %v1703 = vunpack.c.l.b16 %v1618
        %v1704 = vunpack.c.l.b16 %v1619
        %v1705 = vpack.c.b16 %v1696, %v1695
        %v1706 = vpack.c.b16 %v1698, %v1697
        %v1707 = vpack.c.b16 %v1700, %v1699
        %v1708 = vpack.c.b16 %v1702, %v1701
        %v1709 = vpack.c.b16 %v1704, %v1703
        %v1711 = vsel %vm1110, %v1705, 0
        %v1714 = vsel %vm1110, %v1706, 0
        %v1717 = vsel %vm1110, %v1707, 0
        %v1720 = vsel %vm1110, %v1708, 0
        %v1723 = vsel %vm1110, %v1709, 0
        %1725 = vmatprep.subr.bf16.mxu0 0
        %1726 = vmatpush1.bf16.msra.mxu0 %v1620
        %1727 = vmatprep.subr.bf16.mxu0 0
        %1728 = vmatpush1.bf16.msra.mxu0 %v1621
        %1729 = vmatprep.subr.bf16.mxu0 0
        %1730 = vmatpush1.bf16.msra.mxu0 %v1622
        %1731 = vmatprep.subr.bf16.mxu0 0
        %1732 = vmatpush1.bf16.msra.mxu0 %v1623
        %1733 = vmatprep.subr.bf16.mxu0 0
        %1734 = vmatpush1.bf16.msra.mxu0 0
        %1735 = vmatprep.subr.bf16.mxu0 0
        %1736 = vmatpush1.bf16.msra.mxu0 0
        %1737 = vmatprep.subr.bf16.mxu0 0
        %1738 = vmatpush1.bf16.msra.mxu0 0
        %1739 = vmatprep.subr.bf16.mxu0 0
        %1740 = vmatpush1.bf16.msra.mxu0 0
        %1741 = vmatprep.subr.bf16.mxu0 0
        %1742 = vmatpush1.bf16.msra.mxu0 0
        %1743 = vmatprep.subr.bf16.mxu0 0
        %1744 = vmatpush1.bf16.msra.mxu0 0
        %1745 = vmatprep.subr.bf16.mxu0 0
        %1746 = vmatpush1.bf16.msra.mxu0 0
        %1747 = vmatprep.subr.bf16.mxu0 0
        %1748 = vmatpush1.bf16.msra.mxu0 0
        %1749 = vmatprep.subr.bf16.mxu0 0
        %1750 = vmatpush1.bf16.msra.mxu0 0
        %1751 = vmatprep.subr.bf16.mxu0 0
        %1752 = vmatpush1.bf16.msra.mxu0 0
        %1753 = vmatprep.subr.bf16.mxu0 0
        %1754 = vmatpush1.bf16.msra.mxu0 0
        %1755 = vmatprep.subr.bf16.mxu0 0
        %1756 = vmatpush1.bf16.msra.mxu0 0
        %1757 = vmatprep.mubr.bf16.mxu0 0
        %1758 = vmatmul.mubr.bf16.gmra.mrb[0].mxu0 %v1711
        %v1759 = vpop.f32.mrb[0].mxu0
        %v1760 = vadd.f32 %v1638, %v1759
        %v1761 = vpop.f32.mrb[0].mxu0
        %v1762 = vpop.f32.mrb[0].mxu0
        %v1763 = vadd.f32 %v1643, %v1762
        %v1764 = vpop.f32.mrb[0].mxu0
        %1765 = vmatprep.mubr.bf16.mxu0 0
        %1766 = vmatmul.mubr.bf16.gmra.mrb[0].mxu0 %v1714
        %v1767 = vpop.f32.mrb[0].mxu0
        %v1768 = vadd.f32 %v1648, %v1767
        %v1769 = vpop.f32.mrb[0].mxu0
        %v1770 = vpop.f32.mrb[0].mxu0
        %v1771 = vadd.f32 %v1653, %v1770
        %v1772 = vpop.f32.mrb[0].mxu0
        %1773 = vmatprep.mubr.bf16.mxu0 0
        %1774 = vmatmul.mubr.bf16.gmra.mrb[0].mxu0 %v1717
        %v1775 = vpop.f32.mrb[0].mxu0
        %v1776 = vadd.f32 %v1658, %v1775
        %v1777 = vpop.f32.mrb[0].mxu0
        %v1778 = vpop.f32.mrb[0].mxu0
        %v1779 = vadd.f32 %v1663, %v1778
        %v1780 = vpop.f32.mrb[0].mxu0
        %1781 = vmatprep.mubr.bf16.mxu0 0
        %1782 = vmatmul.mubr.bf16.gmra.mrb[0].mxu0 %v1720
        %v1783 = vpop.f32.mrb[0].mxu0
        %v1784 = vadd.f32 %v1668, %v1783
        %v1785 = vpop.f32.mrb[0].mxu0
        %v1786 = vpop.f32.mrb[0].mxu0
        %v1787 = vadd.f32 %v1673, %v1786
        %v1788 = vpop.f32.mrb[0].mxu0
        %1789 = vmatprep.mubr.bf16.mxu0 0
        %1790 = vmatmul.mubr.bf16.gmra.mrb[0].mxu0 %v1723
        %v1791 = vpop.f32.mrb[0].mxu0
        %v1792 = vadd.f32 %v1678, %v1791
        %v1793 = vpop.f32.mrb[0].mxu0
        %v1794 = vpop.f32.mrb[0].mxu0
        %v1795 = vadd.f32 %v1683, %v1794
        %v1796 = vpop.f32.mrb[0].mxu0
        %1797 = vdwg.mxu0
        %v1798 = vld [vmem:[#allocation3] sm:$0xff]
        %v1799 = vld [vmem:[#allocation3 + $0x8] sm:$0xff]
        %v1800 = vld [vmem:[#allocation3 + $0x10] sm:$0xff]
        %v1801 = vld [vmem:[#allocation3 + $0x18] sm:$0xff]
        %v1802 = vld [vmem:[#allocation3 + $0x20] sm:$0xff]
        %v1803 = vld [vmem:[#allocation3 + $0x28] sm:$0xff]
        %v1804 = vld [vmem:[#allocation3 + $0x30] sm:$0xff]
        %v1805 = vld [vmem:[#allocation3 + $0x38] sm:$0xff]
        %v1806 = vadd.f32 %v1798, %v1760
        %v1807 = vadd.f32 %v1799, %v1763
        %v1808 = vadd.f32 %v1800, %v1768
        %v1809 = vadd.f32 %v1801, %v1771
        %v1810 = vadd.f32 %v1802, %v1776
        %v1811 = vadd.f32 %v1803, %v1779
        %v1812 = vadd.f32 %v1804, %v1784
        %v1813 = vadd.f32 %v1805, %v1787
        %1814 = vst.msk [vmem:[#allocation3] sm:$0xff] %vm623, %v1806
        %1815 = vst.msk [vmem:[#allocation3 + $0x8] sm:$0xff] %vm623, %v1807
        %1816 = vst.msk [vmem:[#allocation3 + $0x10] sm:$0xff] %vm623, %v1808
        %1817 = vst.msk [vmem:[#allocation3 + $0x18] sm:$0xff] %vm623, %v1809
        %1818 = vst.msk [vmem:[#allocation3 + $0x20] sm:$0xff] %vm623, %v1810
        %1819 = vst.msk [vmem:[#allocation3 + $0x28] sm:$0xff] %vm623, %v1811
        %1820 = vst.msk [vmem:[#allocation3 + $0x30] sm:$0xff] %vm623, %v1812
        %1821 = vst.msk [vmem:[#allocation3 + $0x38] sm:$0xff] %vm623, %v1813
        %v1822 = vld [vmem:[#allocation2 + $0x8] sm:$0xff]
        %v1823 = vld [vmem:[#allocation2 + $0x18] sm:$0xff]
        %v1824 = vadd.f32 %v1792, %v1822
        %v1825 = vadd.f32 %v1795, %v1823
        %v1826 = vmul.f32 %v1824, 0.70710677
        %v1827 = vmul.f32 %v1825, 0.70710677
        %1828 = vst.msk [vmem:[#allocation2 + $0x8] sm:$0xff] %vm623, %v1826
        %1829 = vst.msk [vmem:[#allocation2 + $0x18] sm:$0xff] %vm623, %v1827
        %v1830 = vld [vmem:[#allocation3] sm:$0xff]
        %v1831 = vld [vmem:[#allocation3 + $0x8] sm:$0xff]
        %v1832 = vld [vmem:[#allocation3 + $0x10] sm:$0xff]
        %v1833 = vld [vmem:[#allocation3 + $0x18] sm:$0xff]
        %v1834 = vld [vmem:[#allocation3 + $0x20] sm:$0xff]
        %v1835 = vld [vmem:[#allocation3 + $0x28] sm:$0xff]
        %v1836 = vld [vmem:[#allocation3 + $0x30] sm:$0xff]
        %v1837 = vld [vmem:[#allocation3 + $0x38] sm:$0xff]
        %v1838 = vmul.f32 %v1830, 0.70710677
        %v1839 = vmul.f32 %v1831, 0.70710677
        %v1840 = vmul.f32 %v1832, 0.70710677
        %v1841 = vmul.f32 %v1833, 0.70710677
        %v1842 = vmul.f32 %v1834, 0.70710677
        %v1843 = vmul.f32 %v1835, 0.70710677
        %v1844 = vmul.f32 %v1836, 0.70710677
        %v1845 = vmul.f32 %v1837, 0.70710677
        %v1846 = vmax.f32 %v1838, 0.0
        %v1847 = vmax.f32 %v1839, 0.0
        %v1848 = vmax.f32 %v1840, 0.0
        %v1849 = vmax.f32 %v1841, 0.0
        %v1850 = vmax.f32 %v1842, 0.0
        %v1851 = vmax.f32 %v1843, 0.0
        %v1852 = vmax.f32 %v1844, 0.0
        %v1853 = vmax.f32 %v1845, 0.0
        %v1854 = vld [vmem:[#allocation16] sm:$0xf]
        %v1855 = vld [vmem:[#allocation16 + $0x4] sm:$0xf]
        %v1856 = vld [vmem:[#allocation16 + $0x8] sm:$0xf]
        %v1857 = vld [vmem:[#allocation16 + $0xc] sm:$0xf]
        %v1858 = vld [vmem:[#allocation16 + $0x10] sm:$0xf]
        %v1859 = vld [vmem:[#allocation16 + $0x14] sm:$0xf]
        %v1860 = vld [vmem:[#allocation16 + $0x18] sm:$0xf]
        %v1861 = vld [vmem:[#allocation16 + $0x1c] sm:$0xf]
        %v1862 = vpack.c.bf16 %v1847, %v1846
        %v1863 = vpack.c.bf16 %v1849, %v1848
        %v1864 = vpack.c.bf16 %v1851, %v1850
        %v1865 = vpack.c.bf16 %v1853, %v1852
        %v1866 = vld [vmem:[#allocation18] sm:$0xff]
        %v1867 = vld [vmem:[#allocation18 + $0x8] sm:$0xff]
        %v1868 = vld [vmem:[#allocation18 + $0x10] sm:$0xff]
        %v1869 = vld [vmem:[#allocation18 + $0x18] sm:$0xff]
        %v1870 = vld [vmem:[#allocation18 + $0x20] sm:$0xff]
        %v1871 = vld [vmem:[#allocation18 + $0x28] sm:$0xff]
        %v1872 = vld [vmem:[#allocation18 + $0x30] sm:$0xff]
        %v1873 = vld [vmem:[#allocation18 + $0x38] sm:$0xff]
        %1875 = vset.pattern.permute.xlu0 0
        %1876 = vperm.xlu0 %1875, %v1866
        %v1877 = vpop.permute.xlu0 %1876
        %1880 = vset.pattern.permute.xlu0 0
        %1881 = vperm.xlu0 %1880, %v1867
        %v1882 = vpop.permute.xlu0 %1881
        %1885 = vset.pattern.permute.xlu0 0
        %1886 = vperm.xlu0 %1885, %v1868
        %v1887 = vpop.permute.xlu0 %1886
        %1890 = vset.pattern.permute.xlu0 0
        %1891 = vperm.xlu0 %1890, %v1869
        %v1892 = vpop.permute.xlu0 %1891
        %1895 = vset.pattern.permute.xlu0 0
        %1896 = vperm.xlu0 %1895, %v1870
        %v1897 = vpop.permute.xlu0 %1896
        %1900 = vset.pattern.permute.xlu0 0
        %1901 = vperm.xlu0 %1900, %v1871
        %v1902 = vpop.permute.xlu0 %1901
        %1905 = vset.pattern.permute.xlu0 0
        %1906 = vperm.xlu0 %1905, %v1872
        %v1907 = vpop.permute.xlu0 %1906
        %1910 = vset.pattern.permute.xlu0 0
        %1911 = vperm.xlu0 %1910, %v1873
        %v1912 = vpop.permute.xlu0 %1911
        %v1922 = vunpack.c.l.b16 %v1854
        %v1923 = vunpack.c.l.b16 %v1855
        %v1924 = vunpack.c.l.b16 %v1856
        %v1925 = vunpack.c.l.b16 %v1857
        %v1926 = vunpack.c.l.b16 %v1858
        %v1927 = vunpack.c.l.b16 %v1859
        %v1928 = vunpack.c.l.b16 %v1860
        %v1929 = vunpack.c.l.b16 %v1861
        %v1930 = vpack.c.b16 %v1923, %v1922
        %v1931 = vpack.c.b16 %v1925, %v1924
        %v1932 = vpack.c.b16 %v1927, %v1926
        %v1933 = vpack.c.b16 %v1929, %v1928
        %v1935 = vsel %vm1110, %v1930, 0
        %v1938 = vsel %vm1110, %v1931, 0
        %v1941 = vsel %vm1110, %v1932, 0
        %v1944 = vsel %vm1110, %v1933, 0
        %1946 = vmatprep.subr.bf16.mxu0 0
        %1947 = vmatpush1.bf16.msra.mxu0 %v1862
        %1948 = vmatprep.subr.bf16.mxu0 0
        %1949 = vmatpush1.bf16.msra.mxu0 %v1863
        %1950 = vmatprep.subr.bf16.mxu0 0
        %1951 = vmatpush1.bf16.msra.mxu0 %v1864
        %1952 = vmatprep.subr.bf16.mxu0 0
        %1953 = vmatpush1.bf16.msra.mxu0 %v1865
        %1954 = vmatprep.subr.bf16.mxu0 0
        %1955 = vmatpush1.bf16.msra.mxu0 0
        %1956 = vmatprep.subr.bf16.mxu0 0
        %1957 = vmatpush1.bf16.msra.mxu0 0
        %1958 = vmatprep.subr.bf16.mxu0 0
        %1959 = vmatpush1.bf16.msra.mxu0 0
        %1960 = vmatprep.subr.bf16.mxu0 0
        %1961 = vmatpush1.bf16.msra.mxu0 0
        %1962 = vmatprep.subr.bf16.mxu0 0
        %1963 = vmatpush1.bf16.msra.mxu0 0
        %1964 = vmatprep.subr.bf16.mxu0 0
        %1965 = vmatpush1.bf16.msra.mxu0 0
        %1966 = vmatprep.subr.bf16.mxu0 0
        %1967 = vmatpush1.bf16.msra.mxu0 0
        %1968 = vmatprep.subr.bf16.mxu0 0
        %1969 = vmatpush1.bf16.msra.mxu0 0
        %1970 = vmatprep.subr.bf16.mxu0 0
        %1971 = vmatpush1.bf16.msra.mxu0 0
        %1972 = vmatprep.subr.bf16.mxu0 0
        %1973 = vmatpush1.bf16.msra.mxu0 0
        %1974 = vmatprep.subr.bf16.mxu0 0
        %1975 = vmatpush1.bf16.msra.mxu0 0
        %1976 = vmatprep.subr.bf16.mxu0 0
        %1977 = vmatpush1.bf16.msra.mxu0 0
        %1978 = vmatprep.mubr.bf16.mxu0 0
        %1979 = vmatmul.mubr.bf16.gmra.mrb[0].mxu0 %v1935
        %v1980 = vpop.f32.mrb[0].mxu0
        %v1981 = vadd.f32 %v1877, %v1980
        %v1982 = vpop.f32.mrb[0].mxu0
        %v1983 = vpop.f32.mrb[0].mxu0
        %v1984 = vadd.f32 %v1882, %v1983
        %v1985 = vpop.f32.mrb[0].mxu0
        %1986 = vmatprep.mubr.bf16.mxu0 0
        %1987 = vmatmul.mubr.bf16.gmra.mrb[0].mxu0 %v1938
        %v1988 = vpop.f32.mrb[0].mxu0
        %v1989 = vadd.f32 %v1887, %v1988
        %v1990 = vpop.f32.mrb[0].mxu0
        %v1991 = vpop.f32.mrb[0].mxu0
        %v1992 = vadd.f32 %v1892, %v1991
        %v1993 = vpop.f32.mrb[0].mxu0
        %1994 = vmatprep.mubr.bf16.mxu0 0
        %1995 = vmatmul.mubr.bf16.gmra.mrb[0].mxu0 %v1941
        %v1996 = vpop.f32.mrb[0].mxu0
        %v1997 = vadd.f32 %v1897, %v1996
        %v1998 = vpop.f32.mrb[0].mxu0
        %v1999 = vpop.f32.mrb[0].mxu0
        %v2000 = vadd.f32 %v1902, %v1999
        %v2001 = vpop.f32.mrb[0].mxu0
        %2002 = vmatprep.mubr.bf16.mxu0 0
        %2003 = vmatmul.mubr.bf16.gmra.mrb[0].mxu0 %v1944
        %v2004 = vpop.f32.mrb[0].mxu0
        %v2005 = vadd.f32 %v1907, %v2004
        %v2006 = vpop.f32.mrb[0].mxu0
        %v2007 = vpop.f32.mrb[0].mxu0
        %v2008 = vadd.f32 %v1912, %v2007
        %v2009 = vpop.f32.mrb[0].mxu0
        %2010 = vdwg.mxu0
        %v2011 = vmax.f32 %v1981, 0.0
        %v2012 = vmax.f32 %v1984, 0.0
        %v2013 = vmax.f32 %v1989, 0.0
        %v2014 = vmax.f32 %v1992, 0.0
        %v2015 = vmax.f32 %v1997, 0.0
        %v2016 = vmax.f32 %v2000, 0.0
        %v2017 = vmax.f32 %v2005, 0.0
        %v2018 = vmax.f32 %v2008, 0.0
        %v2019 = vld [vmem:[#allocation19] sm:$0xf]
        %v2020 = vld [vmem:[#allocation19 + $0x4] sm:$0x3]
        %v2021 = vpack.c.bf16 %v2012, %v2011
        %v2022 = vpack.c.bf16 %v2014, %v2013
        %v2023 = vpack.c.bf16 %v2016, %v2015
        %v2024 = vpack.c.bf16 %v2018, %v2017
        %v2025 = vld [vmem:[#allocation21] sm:$0xff]
        %v2026 = vld [vmem:[#allocation21 + $0x8] sm:$0xf]
        %2028 = vset.pattern.permute.xlu0 0
        %2029 = vperm.xlu0 %2028, %v2025
        %v2030 = vpop.permute.xlu0 %2029
        %2033 = vset.pattern.permute.xlu0 0
        %2034 = vperm.xlu0 %2033, %v2026
        %v2035 = vpop.permute.xlu0 %2034
        %v2039 = vunpack.c.l.b16 %v2019
        %v2040 = vunpack.c.l.b16 %v2020
        %v2041 = vpack.c.b16 %v2040, %v2039
        %v2043 = vsel %vm1110, %v2041, 0
        %2045 = vmatprep.subr.bf16.mxu0 0
        %2046 = vmatpush1.bf16.msra.mxu0 %v2021
        %2047 = vmatprep.subr.bf16.mxu0 0
        %2048 = vmatpush1.bf16.msra.mxu0 %v2022
        %2049 = vmatprep.subr.bf16.mxu0 0
        %2050 = vmatpush1.bf16.msra.mxu0 %v2023
        %2051 = vmatprep.subr.bf16.mxu0 0
        %2052 = vmatpush1.bf16.msra.mxu0 %v2024
        %2053 = vmatprep.subr.bf16.mxu0 0
        %2054 = vmatpush1.bf16.msra.mxu0 0
        %2055 = vmatprep.subr.bf16.mxu0 0
        %2056 = vmatpush1.bf16.msra.mxu0 0
        %2057 = vmatprep.subr.bf16.mxu0 0
        %2058 = vmatpush1.bf16.msra.mxu0 0
        %2059 = vmatprep.subr.bf16.mxu0 0
        %2060 = vmatpush1.bf16.msra.mxu0 0
        %2061 = vmatprep.subr.bf16.mxu0 0
        %2062 = vmatpush1.bf16.msra.mxu0 0
        %2063 = vmatprep.subr.bf16.mxu0 0
        %2064 = vmatpush1.bf16.msra.mxu0 0
        %2065 = vmatprep.subr.bf16.mxu0 0
        %2066 = vmatpush1.bf16.msra.mxu0 0
        %2067 = vmatprep.subr.bf16.mxu0 0
        %2068 = vmatpush1.bf16.msra.mxu0 0
        %2069 = vmatprep.subr.bf16.mxu0 0
        %2070 = vmatpush1.bf16.msra.mxu0 0
        %2071 = vmatprep.subr.bf16.mxu0 0
        %2072 = vmatpush1.bf16.msra.mxu0 0
        %2073 = vmatprep.subr.bf16.mxu0 0
        %2074 = vmatpush1.bf16.msra.mxu0 0
        %2075 = vmatprep.subr.bf16.mxu0 0
        %2076 = vmatpush1.bf16.msra.mxu0 0
        %2077 = vmatprep.mubr.bf16.mxu0 0
        %2078 = vmatmul.mubr.bf16.gmra.mrb[0].mxu0 %v2043
        %v2079 = vpop.f32.mrb[0].mxu0
        %v2080 = vadd.f32 %v2030, %v2079
        %v2081 = vpop.f32.mrb[0].mxu0
        %v2082 = vpop.f32.mrb[0].mxu0
        %v2083 = vadd.f32 %v2035, %v2082
        %v2084 = vpop.f32.mrb[0].mxu0
        %2085 = vdwg.mxu0
        %2086 = vst.msk [vmem:[%s546] sm:$0xff] %vm623, %v2080
        %vm2087 = vcmask 125952
        %2088 = vst.msk [vmem:[%s546 + $0x8] sm:$0xf] %vm2087, %v2083
        %s2089 = sand.u32 %s277, 1
        %s2090 = scalar_lea.sflag [#allocation6], %s2089
        %s2091 = sand.u32 %s277, 1
        %s2092 = smul.addr %s2091, 16
        %s2093 = scalar_lea.vmem [#allocation22], %s2092
        // Predicated region
        $region109: #{tpu_custom_call.1} parent=63 // pred_check
          %p2094 = pneg %p287
        $region110: #{tpu_custom_call.1} parent=63 // pred_check_branch
          %2096 = sbr.rel (%p2094) target = $region112
        $region111: #{tpu_custom_call.1} parent=63 // pred_region
          %s2098 = ssub.s32 256, 256
          %2099 = vsyncadd %s2090, %s2098
          %s2100 = smul.addr %s33, 2
          %s2101 = smul.addr %s2100, 128
          %s2102 = scalar_lea.hbm %s11, %s2101
          %s2103 = sshll.u32 %s2093, 4
          %s2104 = int_to_ptr.vmem [resolvable:$true] %s2103
          %2109 = dma.vmem_to_hbm [thread:$0]  %s2104, 256, %s2102, %s2090, 128, 128, 8
        $region112: #{tpu_custom_call.1} parent=63 // pred_fallthru
          _
      $region64: #{tpu_custom_call.1} parent=5 // pred_fallthru
        _
      %p2110 = scmp.le.s32.totalorder 2, %s28
      // Predicated region
      $region113: #{tpu_custom_call.1} parent=5 // pred_check
        %p2111 = pneg %p2110
      $region114: #{tpu_custom_call.1} parent=5 // pred_check_branch
        %2113 = sbr.rel (%p2111) target = $region116
      $region115: #{tpu_custom_call.1} parent=5 // pred_region
        %s2114 = ssub.s32 %s28, 2
        // Predicated region
        $region117: #{tpu_custom_call.1} parent=115 // pred_check
          %p2115 = pneg %p293
        $region118: #{tpu_custom_call.1} parent=115 // pred_check_branch
          %2117 = sbr.rel (%p2115) target = $region120
        $region119: #{tpu_custom_call.1} parent=115 // pred_region
          %s2118 = sand.u32 %s278, 1
          %s2119 = scalar_lea.sflag [#allocation6], %s2118
          %s2120 = sand.u32 %s278, 1
          %s2121 = smul.addr %s2120, 16
          %s2122 = scalar_lea.vmem [#allocation22], %s2121
          %2123 = dma.done %s2119, 256
        $region120: #{tpu_custom_call.1} parent=115 // pred_fallthru
          _
      $region116: #{tpu_custom_call.1} parent=5 // pred_fallthru
        _
    $region6: #{tpu_custom_call.1} parent=1 // loop_footer
      %s32 = sadd.s32 1, %s28
    $region7: #{tpu_custom_call.1} parent=1 // loop_footer_branch
      %27 = sbr.rel target = $region3
    $region8: #{tpu_custom_call.1} parent=1 // loop_exit
      _
    %2124 = vsyncpa [#allocation5], 1
    %s2125 = scalar_lea.sflag [#allocation5], 1
    %2126 = vsyncpa %s2125, 1
    %2127 = vsyncpa [#allocation8], 1
    %2128 = vsyncpa [#allocation11], 1
    %2129 = vsyncpa [#allocation14], 1
    %2130 = vsyncpa [#allocation17], 1
    %2131 = vsyncpa [#allocation20], 1
    %2132 = vsyncpa [#allocation6], 1
    %s2133 = scalar_lea.sflag [#allocation6], 1
    %2134 = vsyncpa %s2133, 1

</llo_original>
